<compile_context>
chip_gen: v7x
topology: tpu7x:2x2x1
jax: 0.10.0
libtpu: 0.0.40
codegen_flags: <defaults>
</compile_context>

<pallas_src>
import jax
import jax.numpy as jnp
from jax.experimental import pallas as pl
from jax.experimental.pallas import tpu as pltpu

TEMPERATURE = 0.07
NEG = -9e15        # matches sim.masked_fill_(mask, -9e15)
NORM_EPS = 1e-4    # per-row norm clamp (documented approximation of the
                   # reference's pairwise max(|zi|*|zj|, 1e-8) clamp; identical
                   # for any non-degenerate embeddings)


def _round_up(x, m):
    return (x + m - 1) // m * m


def _pick_tile(total, cap):
    """Largest multiple of 128 that divides `total` and is <= cap (>= 128)."""
    t = max(128, min(cap, total))
    t -= t % 128
    t = max(t, 128)
    while total % t:
        t -= 128
    return t


def _ntxent_kernel(zq_ref, zkt_ref, bias_ref, pos_ref, out_ref,
                   m_ref, l_ref, diff_ref):
    q = pl.program_id(0)
    k = pl.program_id(1)
    tq = zq_ref.shape[0]
    tk = zkt_ref.shape[1]

    @pl.when(k == 0)
    def _init():
        m_ref[...] = jnp.full(m_ref.shape, NEG, m_ref.dtype)
        l_ref[...] = jnp.zeros(l_ref.shape, l_ref.dtype)
        # Local (col - row) offsets, built once per query-row sweep.  The
        # global diagonal is then a single compare per grid step below.
        diff_ref[...] = (jax.lax.broadcasted_iota(jnp.int32, (tq, tk), 1)
                         - jax.lax.broadcasted_iota(jnp.int32, (tq, tk), 0))

    # Cosine-similarity tile (already temperature-scaled: 1/T is folded into
    # the pre-normalized query stream in the wrapper).  Standard (tq,d)x(d,tk)
    # MXU product — the key stream is fed pre-transposed.
    s = jnp.dot(zq_ref[...], zkt_ref[...], preferred_element_type=jnp.float32)
    # Padded key columns: additive bias (0 valid / NEG padded), broadcast over
    # the sublane (row) axis.
    s = s + bias_ref[...]
    # Self-similarity mask: global row == global col  <=>  (col-row) == q*tq - k*tk.
    s = jnp.where(diff_ref[...] == (q * tq - k * tk), NEG, s)

    # Online (flash-style) logsumexp update.
    m_prev = m_ref[...]
    m_new = jnp.maximum(m_prev, jnp.max(s, axis=-1, keepdims=True))
    l_ref[...] = (jnp.exp(m_prev - m_new) * l_ref[...]
                  + jnp.sum(jnp.exp(s - m_new), axis=-1, keepdims=True))
    m_ref[...] = m_new

    @pl.when(k == pl.num_programs(1) - 1)
    def _finalize():
        out_ref[...] = m_ref[...] + jnp.log(l_ref[...]) - pos_ref[...]


def _l2_normalize(x):
    nrm = jnp.sqrt(jnp.sum(x * x, axis=-1, keepdims=True))
    return x / jnp.maximum(nrm, NORM_EPS)


def ntxent_loss(z1, z2, temperature=TEMPERATURE):
    n, d = z1.shape
    assert z2.shape == (n, d)
    inv_temp = 1.0 / temperature

    # ---- O(2N*D) preprocessing in plain JAX (hoisted out of the kernel) ----
    z1h = _l2_normalize(z1.astype(jnp.float32))
    z2h = _l2_normalize(z2.astype(jnp.float32))
    # Positive logits: the sim matrix is symmetric, so diag(sim, N) and
    # diag(sim, -N) are identical — one row-dot per pair covers both halves.
    pos = jnp.sum(z1h * z2h, axis=-1) * inv_temp                  # (n,)

    # Lane/MXU-dense padding: rows of each view and features to multiples of 128.
    n_pad = _round_up(n, 128)
    d_pad = _round_up(d, 128)
    z1p = jnp.pad(z1h, ((0, n_pad - n), (0, d_pad - d)))
    z2p = jnp.pad(z2h, ((0, n_pad - n), (0, d_pad - d)))
    zh = jnp.concatenate([z1p, z2p], axis=0)                      # (2*n_pad, d_pad)
    zq = zh * inv_temp                                            # query stream
    zkt = zh.T                                                    # (d_pad, 2*n_pad) key stream

    pos_p = jnp.pad(pos, (0, n_pad - n))
    pos_full = jnp.concatenate([pos_p, pos_p])[:, None]           # (2*n_pad, 1)

    # Additive column bias: 0 on real key columns, NEG on zero-padded ones.
    col = jnp.arange(2 * n_pad)
    bias = jnp.where((col % n_pad) < n, 0.0, NEG).astype(jnp.float32)[None, :]

    # ---- tile sizes: multiples of 128, bounded by a per-stream VMEM budget
    # (~4 MiB per buffer, x2 double-buffering) so the whole kernel fits the
    # explicit 32 MiB scoped-VMEM limit on v5e/v6e/v7x.  tq <= n_pad keeps the
    # parallel query axis at >= 2 blocks for v7x's two TensorCores.
    row_bytes = d_pad * 4
    vmem_cap_rows = max(128, ((4 << 20) // row_bytes) // 128 * 128)
    tq = _pick_tile(2 * n_pad, min(512, n_pad, vmem_cap_rows))
    tk = _pick_tile(2 * n_pad, min(512, vmem_cap_rows))
    num_q = (2 * n_pad) // tq
    num_k = (2 * n_pad) // tk

    per_row = pl.pallas_call(
        _ntxent_kernel,
        out_shape=jax.ShapeDtypeStruct((2 * n_pad, 1), jnp.float32),
        grid_spec=pltpu.PrefetchScalarGridSpec(
            num_scalar_prefetch=0,
            grid=(num_q, num_k),
            in_specs=[
                pl.BlockSpec((tq, d_pad), lambda qi, ki: (qi, 0)),   # queries
                pl.BlockSpec((d_pad, tk), lambda qi, ki: (0, ki)),   # keys (pre-T)
                pl.BlockSpec((1, tk), lambda qi, ki: (0, ki)),       # col bias
                pl.BlockSpec((tq, 1), lambda qi, ki: (qi, 0)),       # positives
            ],
            out_specs=pl.BlockSpec((tq, 1), lambda qi, ki: (qi, 0)),
            scratch_shapes=[
                pltpu.VMEM((tq, 1), jnp.float32),     # running max
                pltpu.VMEM((tq, 1), jnp.float32),     # running sum
                pltpu.VMEM((tq, tk), jnp.int32),      # (col - row) iota diff
            ],
        ),
        compiler_params=pltpu.CompilerParams(
            dimension_semantics=("parallel", "arbitrary"),
            vmem_limit_bytes=32 * 1024 * 1024),
    )(zq, zkt, bias, pos_full)

    rows = per_row[:, 0]
    valid = (jnp.arange(2 * n_pad) % n_pad) < n
    return jnp.sum(jnp.where(valid, rows, 0.0)) / (2 * n)


def ntxent_loss_ref(z1, z2, temperature=TEMPERATURE):
    # Pure-JAX f32 reference mirroring the PyTorch module.
    n = z1.shape[0]
    z = jnp.concatenate([z1, z2], axis=0).astype(jnp.float32)
    norms = jnp.linalg.norm(z, axis=-1, keepdims=True)
    dots = jnp.dot(z, z.T, precision=jax.lax.Precision.HIGHEST)
    sim = dots / jnp.maximum(norms * norms.T, 1e-8) / temperature
    sim = jnp.where(jnp.eye(2 * n, dtype=bool), -9e15, sim)
    positives = jnp.concatenate(
        [jnp.diagonal(sim, offset=n), jnp.diagonal(sim, offset=-n)], axis=0)
    return jnp.mean(-positives + jax.scipy.special.logsumexp(sim, axis=1))


if __name__ == "__main__":
    key = jax.random.PRNGKey(0)
    k1, k2, k3, k4 = jax.random.split(key, 4)

    # Small shape consistent with the module: batch=4 per view, hidden=32.
    z1 = jax.random.normal(k1, (4, 32), dtype=jnp.float32)
    z2 = jax.random.normal(k2, (4, 32), dtype=jnp.float32)
    loss = jax.block_until_ready(ntxent_loss(z1, z2))
    ref = jax.block_until_ready(ntxent_loss_ref(z1, z2))
    assert jnp.allclose(loss, ref, rtol=1e-5, atol=1e-5), (loss, ref)

    # Larger shape exercising the multi-tile flash-LSE path (grid > 1 on both
    # axes, row + feature padding, column-bias masking).
    z1 = jax.random.normal(k3, (300, 64), dtype=jnp.float32)
    z2 = jax.random.normal(k4, (300, 64), dtype=jnp.float32)
    loss = jax.block_until_ready(ntxent_loss(z1, z2))
    ref = jax.block_until_ready(ntxent_loss_ref(z1, z2))
    assert jnp.allclose(loss, ref, rtol=1e-4, atol=1e-4), (loss, ref)

    print("KERNEL_OK")
</pallas_src>

<mosaic_0001>
module attributes {stable_mosaic.version = 11 : i64} {
  func.func @_ntxent_kernel(%arg0: i32, %arg1: i32, %arg2: memref<128x128xf32, #tpu.memory_space<vmem>>, %arg3: memref<128x256xf32, #tpu.memory_space<vmem>>, %arg4: memref<1x256xf32, #tpu.memory_space<vmem>>, %arg5: memref<128x1xf32, #tpu.memory_space<vmem>>, %arg6: memref<128x1xf32, #tpu.memory_space<vmem>>, %arg7: memref<128x1xf32, #tpu.memory_space<vmem>>, %arg8: memref<128x1xf32, #tpu.memory_space<vmem>>, %arg9: memref<128x256xi32, #tpu.memory_space<vmem>>) attributes {dimension_semantics = [#tpu.dimension_semantics<parallel>, #tpu.dimension_semantics<arbitrary>], iteration_bounds = array<i64: 2, 1>, scalar_prefetch = 0 : i64, scratch_operands = 3 : i64, tpu.core_type = #tpu.core_type<tc>, window_params = [{transform_indices = @transform_0, window_bounds = array<i64: 128, 128>}, {transform_indices = @transform_1, window_bounds = array<i64: 128, 256>}, {transform_indices = @transform_2, window_bounds = array<i64: 1, 256>}, {transform_indices = @transform_3, window_bounds = array<i64: 128, 1>}, {transform_indices = @transform_4, window_bounds = array<i64: 128, 1>}]} {
    %c0_i32 = arith.constant 0 : i32
    %0 = arith.cmpi eq, %arg1, %c0_i32 : i32
    %1 = arith.extui %0 : i1 to i32
    %c0_i32_0 = arith.constant 0 : i32
    %2 = arith.cmpi ne, %1, %c0_i32_0 : i32
    scf.if %2 {
      %cst_21 = arith.constant -9.000000e+15 : f32
      %36 = vector.broadcast %cst_21 : f32 to vector<128x1xf32>
      %c0_22 = arith.constant 0 : index
      %c0_23 = arith.constant 0 : index
      %37 = vector.load %arg7[%c0_22, %c0_23] : memref<128x1xf32, #tpu.memory_space<vmem>>, vector<128x1xf32>
      tpu.vector_store %arg7[%c0_22, %c0_23], %36 {strides = array<i32>} : memref<128x1xf32, #tpu.memory_space<vmem>>, vector<128x1xf32>,
      %cst_24 = arith.constant 0.000000e+00 : f32
      %38 = vector.broadcast %cst_24 : f32 to vector<128x1xf32>
      %c0_25 = arith.constant 0 : index
      %c0_26 = arith.constant 0 : index
      %39 = vector.load %arg8[%c0_25, %c0_26] : memref<128x1xf32, #tpu.memory_space<vmem>>, vector<128x1xf32>
      tpu.vector_store %arg8[%c0_25, %c0_26], %38 {strides = array<i32>} : memref<128x1xf32, #tpu.memory_space<vmem>>, vector<128x1xf32>,
      %40 = tpu.iota {dimensions = array<i32: 1>} : vector<128x256xi32>
      %41 = tpu.iota {dimensions = array<i32: 0>} : vector<128x256xi32>
      %42 = arith.subi %40, %41 : vector<128x256xi32>
      %c0_27 = arith.constant 0 : index
      %c0_28 = arith.constant 0 : index
      %43 = vector.load %arg9[%c0_27, %c0_28] : memref<128x256xi32, #tpu.memory_space<vmem>>, vector<128x256xi32>
      tpu.vector_store %arg9[%c0_27, %c0_28], %42 {strides = array<i32>} : memref<128x256xi32, #tpu.memory_space<vmem>>, vector<128x256xi32>,
    } else {
    }
    %c0 = arith.constant 0 : index
    %c0_1 = arith.constant 0 : index
    %3 = vector.load %arg2[%c0, %c0_1] : memref<128x128xf32, #tpu.memory_space<vmem>>, vector<128x128xf32>
    %c0_2 = arith.constant 0 : index
    %c0_3 = arith.constant 0 : index
    %4 = vector.load %arg3[%c0_2, %c0_3] : memref<128x256xf32, #tpu.memory_space<vmem>>, vector<128x256xf32>
    %cst = arith.constant dense<0.000000e+00> : vector<128x256xf32>
    %5 = tpu.matmul %3, %4, %cst {dimension_numbers = #tpu.dot_dimension_numbers<[1], [0], [0], [1], [0, 0, 1, 1], [], []>} : vector<128x128xf32>, vector<128x256xf32>, vector<128x256xf32> -> vector<128x256xf32>
    %c0_4 = arith.constant 0 : index
    %c0_5 = arith.constant 0 : index
    %6 = vector.load %arg4[%c0_4, %c0_5] : memref<1x256xf32, #tpu.memory_space<vmem>>, vector<1x256xf32>
    %7 = vector.broadcast %6 : vector<1x256xf32> to vector<128x256xf32>
    %8 = arith.addf %5, %7 : vector<128x256xf32>
    %c0_6 = arith.constant 0 : index
    %c0_7 = arith.constant 0 : index
    %9 = vector.load %arg9[%c0_6, %c0_7] : memref<128x256xi32, #tpu.memory_space<vmem>>, vector<128x256xi32>
    %c128_i32 = arith.constant 128 : i32
    %10 = arith.muli %arg0, %c128_i32 : i32
    %c256_i32 = arith.constant 256 : i32
    %11 = arith.muli %arg1, %c256_i32 : i32
    %12 = arith.subi %10, %11 : i32
    %13 = vector.broadcast %12 : i32 to vector<128x256xi32>
    %14 = arith.cmpi eq, %9, %13 : vector<128x256xi32>
    %cst_8 = arith.constant -9.000000e+15 : f32
    %15 = vector.broadcast %cst_8 : f32 to vector<128x256xf32>
    %16 = arith.select %14, %15, %8 : vector<128x256xi1>, vector<128x256xf32>
    %c0_9 = arith.constant 0 : index
    %c0_10 = arith.constant 0 : index
    %17 = vector.load %arg7[%c0_9, %c0_10] : memref<128x1xf32, #tpu.memory_space<vmem>>, vector<128x1xf32>
    %cst_11 = arith.constant dense<0xFF800000> : vector<128xf32>
    %18 = vector.multi_reduction <maximumf>, %16, %cst_11 [1] : vector<128x256xf32> to vector<128xf32>
    %19 = vector.shape_cast %18 : vector<128xf32> to vector<128x1xf32>
    %20 = arith.maximumf %17, %19 : vector<128x1xf32>
    %21 = arith.subf %17, %20 : vector<128x1xf32>
    %22 = math.exp %21 : vector<128x1xf32>
    %c0_12 = arith.constant 0 : index
    %c0_13 = arith.constant 0 : index
    %23 = vector.load %arg8[%c0_12, %c0_13] : memref<128x1xf32, #tpu.memory_space<vmem>>, vector<128x1xf32>
    %24 = arith.mulf %22, %23 : vector<128x1xf32>
    %25 = vector.broadcast %20 : vector<128x1xf32> to vector<128x256xf32>
    %26 = arith.subf %16, %25 : vector<128x256xf32>
    %27 = math.exp %26 : vector<128x256xf32>
    %cst_14 = arith.constant dense<0.000000e+00> : vector<128xf32>
    %28 = vector.multi_reduction <add>, %27, %cst_14 [1] : vector<128x256xf32> to vector<128xf32>
    %29 = vector.shape_cast %28 : vector<128xf32> to vector<128x1xf32>
    %30 = arith.addf %24, %29 : vector<128x1xf32>
    %c0_15 = arith.constant 0 : index
    %c0_16 = arith.constant 0 : index
    %31 = vector.load %arg8[%c0_15, %c0_16] : memref<128x1xf32, #tpu.memory_space<vmem>>, vector<128x1xf32>
    tpu.vector_store %arg8[%c0_15, %c0_16], %30 {strides = array<i32>} : memref<128x1xf32, #tpu.memory_space<vmem>>, vector<128x1xf32>,
    %c0_17 = arith.constant 0 : index
    %c0_18 = arith.constant 0 : index
    %32 = vector.load %arg7[%c0_17, %c0_18] : memref<128x1xf32, #tpu.memory_space<vmem>>, vector<128x1xf32>
    tpu.vector_store %arg7[%c0_17, %c0_18], %20 {strides = array<i32>} : memref<128x1xf32, #tpu.memory_space<vmem>>, vector<128x1xf32>,
    %c0_i32_19 = arith.constant 0 : i32
    %33 = arith.cmpi eq, %arg1, %c0_i32_19 : i32
    %34 = arith.extui %33 : i1 to i32
    %c0_i32_20 = arith.constant 0 : i32
    %35 = arith.cmpi ne, %34, %c0_i32_20 : i32
    scf.if %35 {
      %c0_21 = arith.constant 0 : index
      %c0_22 = arith.constant 0 : index
      %36 = vector.load %arg7[%c0_21, %c0_22] : memref<128x1xf32, #tpu.memory_space<vmem>>, vector<128x1xf32>
      %c0_23 = arith.constant 0 : index
      %c0_24 = arith.constant 0 : index
      %37 = vector.load %arg8[%c0_23, %c0_24] : memref<128x1xf32, #tpu.memory_space<vmem>>, vector<128x1xf32>
      %38 = math.log %37 : vector<128x1xf32>
      %39 = arith.addf %36, %38 : vector<128x1xf32>
      %c0_25 = arith.constant 0 : index
      %c0_26 = arith.constant 0 : index
      %40 = vector.load %arg5[%c0_25, %c0_26] : memref<128x1xf32, #tpu.memory_space<vmem>>, vector<128x1xf32>
      %41 = arith.subf %39, %40 : vector<128x1xf32>
      %c0_27 = arith.constant 0 : index
      %c0_28 = arith.constant 0 : index
      %42 = vector.load %arg6[%c0_27, %c0_28] : memref<128x1xf32, #tpu.memory_space<vmem>>, vector<128x1xf32>
      tpu.vector_store %arg6[%c0_27, %c0_28], %41 {strides = array<i32>} : memref<128x1xf32, #tpu.memory_space<vmem>>, vector<128x1xf32>,
    } else {
    }
    return
  }
  func.func @transform_0(%arg0: i32, %arg1: i32) -> (i32, i32) {
    %c0_i32 = arith.constant 0 : i32
    %c0_i32_0 = arith.constant 0 : i32
    return %arg0, %c0_i32 : i32, i32
  }
  func.func @transform_1(%arg0: i32, %arg1: i32) -> (i32, i32) {
    %c0_i32 = arith.constant 0 : i32
    %c0_i32_0 = arith.constant 0 : i32
    return %c0_i32, %arg1 : i32, i32
  }
  func.func @transform_2(%arg0: i32, %arg1: i32) -> (i32, i32) {
    %c0_i32 = arith.constant 0 : i32
    %c0_i32_0 = arith.constant 0 : i32
    return %c0_i32, %arg1 : i32, i32
  }
  func.func @transform_3(%arg0: i32, %arg1: i32) -> (i32, i32) {
    %c0_i32 = arith.constant 0 : i32
    %c0_i32_0 = arith.constant 0 : i32
    return %arg0, %c0_i32 : i32, i32
  }
  func.func @transform_4(%arg0: i32, %arg1: i32) -> (i32, i32) {
    %c0_i32 = arith.constant 0 : i32
    %c0_i32_0 = arith.constant 0 : i32
    return %arg0, %c0_i32 : i32, i32
  }
}

</mosaic_0001>

<llo_original>
// kernel: tpu_custom_call.1
$region0: #{tpu_custom_call.1}
  #allocation0 [shape = 'u32[]', space=smem, size = 0x4, offset = 0x4, fixed_abs, tag = 'smem constant byte address 0x4 - core index']
  #allocation1 [shape = 'u32[144,128]{1,0:T(1,128)}', space=vmem, size = 0x12000, scoped, tag = 'internal scratch']
  #allocation2 [shape = 'f32[128,1]{1,0:T(8,128)}', space=vmem, size = 0x10000, scoped, tag = 'scratch operand']
  #allocation3 [shape = 'f32[128,1]{1,0:T(8,128)}', space=vmem, size = 0x10000, scoped, tag = 'scratch operand']
  #allocation4 [shape = 's32[128,256]{1,0:T(8,128)}', space=vmem, size = 0x20000, scoped, tag = 'scratch operand']
  %s0 = inlined_call_operand.vmem [shape: f32[256,128], index: 0, kind: input, shape index: {}]
  %s1 = inlined_call_operand.hbm [shape: f32[128,256], index: 1, kind: input, shape index: {}]
  %s2 = inlined_call_operand.vmem [shape: f32[1,256], index: 2, kind: input, shape index: {}]
  %s3 = inlined_call_operand.vmem [shape: f32[256,1], index: 3, kind: input, shape index: {}]
  %s4 = inlined_call_operand.vmem [shape: f32[256,1], index: 4, kind: output, shape index: {}]
  %s5 = sld [smem:[#allocation0]]
  $region61: #{tpu_custom_call.1} parent=0
    _
  %s7 = ssub.s32 1, %s5
  %s8 = scalar_select 0, %s7, %s5
  $region1: #{tpu_custom_call.1} parent=0
    #allocation5 [shape = 'u8[131072]{0}', space=vmem, size = 0x20000, scoped, tag = 'input window, operand 1, single buffered']
    #allocation6 [shape = 's32[2]{0}', space=sflag, size = 0x8, scoped, tag = 'scoped memory for tpu_custom_call.1']
    %9 = vsyncpa [#allocation6], 0
    loop: start=0, step=1, limit=4
    $region2: #{tpu_custom_call.1} parent=1 // loop_pre_header
      _
    $region3: #{tpu_custom_call.1} parent=1 // loop_header
      %s11 = sphi 0, %s15
      %p12 = scmp.ge.s32.totalorder %s11, 4
      %s18 = sphi 0, %s30
      %s19 = sphi 0, %s26
      %s20 = sphi 0, %s18
      %s21 = sphi 0, %s19
      %s22 = sphi 0, %s20
      %s23 = sphi 0, %s21
      %s33 = sphi 0, %s35
      %s36 = sphi 0, %s33
      %s37 = sphi 0, %s36
      %s53 = sphi 0, %s37
      %s59 = sphi 0, %s61
      %s62 = sphi 0, %s59
      %s63 = sphi 0, %s62
      %s79 = sphi 0, %s63
      %s85 = sphi 0, %s87
      %s88 = sphi 0, %s85
      %s89 = sphi 0, %s88
      %s105 = sphi 0, %s89
      %s111 = sphi 0, %s113
      %s114 = sphi 0, %s111
      %s115 = sphi 0, %s114
      %s131 = sphi 0, %s115
      %s137 = sphi 0, %s139
      %s140 = sphi 0, %s137
      %s141 = sphi 0, %s140
      %s157 = sphi 0, %s141
    $region4: #{tpu_custom_call.1} parent=1 // loop_header_branch
      %14 = sbr.rel (%p12) target = $region8
    $region5: #{tpu_custom_call.1} parent=1 // loop_body
      %s16 = ssub.s32 %s11, 1
      %s17 = ssub.s32 %s11, 2
      %s24 = sadd.s32 1, %s19
      %p25 = scmp.ge.s32.totalorder %s24, 1
      %s26 = scalar_select %p25, 0, %s24
      %s27 = sadd.s32 1, %s18
      %s28 = scalar_select %p25, %s27, %s18
      %p29 = scmp.ge.s32.totalorder %s28, 2
      %s30 = scalar_select %p29, 0, %s28
      %s31 = ssub.s32 %s18, %s30
      %p32 = scmp.eq.s32.totalorder %s31, 0
      %s34 = sadd.s32 %s33, 1
      %s35 = scalar_select %p32, %s33, %s34
      %p38 = pneg %p32
      %p39 = scmp.eq.s32.totalorder %s11, 1
      %p40 = por %p38, %p39
      %p41 = scmp.ne.s32.totalorder %s33, %s36
      %p42 = scmp.eq.s32.totalorder %s11, 0
      %p43 = por %p41, %p42
      %p44 = scmp.ne.s32.totalorder %s33, %s36
      %p45 = scmp.eq.s32.totalorder %s16, 1
      %p46 = por %p44, %p45
      %p47 = scmp.ne.s32.totalorder %s36, %s37
      %p48 = scmp.eq.s32.totalorder %s16, 0
      %p49 = por %p47, %p48
      %p50 = scmp.ne.s32.totalorder %s36, %s37
      %p51 = scmp.eq.s32.totalorder %s17, 1
      %p52 = por %p50, %p51
      %p54 = scmp.ne.s32.totalorder %s37, %s53
      %p55 = scmp.eq.s32.totalorder %s17, 0
      %p56 = por %p54, %p55
      %s57 = ssub.s32 %s19, %s26
      %p58 = scmp.eq.s32.totalorder %s57, 0
      %s60 = sadd.s32 %s59, 1
      %s61 = scalar_select %p58, %s59, %s60
      %p64 = pneg %p58
      %p65 = scmp.eq.s32.totalorder %s11, 1
      %p66 = por %p64, %p65
      %p67 = scmp.ne.s32.totalorder %s59, %s62
      %p68 = scmp.eq.s32.totalorder %s11, 0
      %p69 = por %p67, %p68
      %p70 = scmp.ne.s32.totalorder %s59, %s62
      %p71 = scmp.eq.s32.totalorder %s16, 1
      %p72 = por %p70, %p71
      %p73 = scmp.ne.s32.totalorder %s62, %s63
      %p74 = scmp.eq.s32.totalorder %s16, 0
      %p75 = por %p73, %p74
      %p76 = scmp.ne.s32.totalorder %s62, %s63
      %p77 = scmp.eq.s32.totalorder %s17, 1
      %p78 = por %p76, %p77
      %p80 = scmp.ne.s32.totalorder %s63, %s79
      %p81 = scmp.eq.s32.totalorder %s17, 0
      %p82 = por %p80, %p81
      %s83 = ssub.s32 %s19, %s26
      %p84 = scmp.eq.s32.totalorder %s83, 0
      %s86 = sadd.s32 %s85, 1
      %s87 = scalar_select %p84, %s85, %s86
      %p90 = pneg %p84
      %p91 = scmp.eq.s32.totalorder %s11, 1
      %p92 = por %p90, %p91
      %p93 = scmp.ne.s32.totalorder %s85, %s88
      %p94 = scmp.eq.s32.totalorder %s11, 0
      %p95 = por %p93, %p94
      %p96 = scmp.ne.s32.totalorder %s85, %s88
      %p97 = scmp.eq.s32.totalorder %s16, 1
      %p98 = por %p96, %p97
      %p99 = scmp.ne.s32.totalorder %s88, %s89
      %p100 = scmp.eq.s32.totalorder %s16, 0
      %p101 = por %p99, %p100
      %p102 = scmp.ne.s32.totalorder %s88, %s89
      %p103 = scmp.eq.s32.totalorder %s17, 1
      %p104 = por %p102, %p103
      %p106 = scmp.ne.s32.totalorder %s89, %s105
      %p107 = scmp.eq.s32.totalorder %s17, 0
      %p108 = por %p106, %p107
      %s109 = ssub.s32 %s18, %s30
      %p110 = scmp.eq.s32.totalorder %s109, 0
      %s112 = sadd.s32 %s111, 1
      %s113 = scalar_select %p110, %s111, %s112
      %p116 = pneg %p110
      %p117 = scmp.eq.s32.totalorder %s11, 1
      %p118 = por %p116, %p117
      %p119 = scmp.ne.s32.totalorder %s111, %s114
      %p120 = scmp.eq.s32.totalorder %s11, 0
      %p121 = por %p119, %p120
      %p122 = scmp.ne.s32.totalorder %s111, %s114
      %p123 = scmp.eq.s32.totalorder %s16, 1
      %p124 = por %p122, %p123
      %p125 = scmp.ne.s32.totalorder %s114, %s115
      %p126 = scmp.eq.s32.totalorder %s16, 0
      %p127 = por %p125, %p126
      %p128 = scmp.ne.s32.totalorder %s114, %s115
      %p129 = scmp.eq.s32.totalorder %s17, 1
      %p130 = por %p128, %p129
      %p132 = scmp.ne.s32.totalorder %s115, %s131
      %p133 = scmp.eq.s32.totalorder %s17, 0
      %p134 = por %p132, %p133
      %s135 = ssub.s32 %s18, %s30
      %p136 = scmp.eq.s32.totalorder %s135, 0
      %s138 = sadd.s32 %s137, 1
      %s139 = scalar_select %p136, %s137, %s138
      %p142 = pneg %p136
      %p143 = scmp.eq.s32.totalorder %s11, 1
      %p144 = por %p142, %p143
      %p145 = scmp.ne.s32.totalorder %s137, %s140
      %p146 = scmp.eq.s32.totalorder %s11, 0
      %p147 = por %p145, %p146
      %p148 = scmp.ne.s32.totalorder %s137, %s140
      %p149 = scmp.eq.s32.totalorder %s16, 1
      %p150 = por %p148, %p149
      %p151 = scmp.ne.s32.totalorder %s140, %s141
      %p152 = scmp.eq.s32.totalorder %s16, 0
      %p153 = por %p151, %p152
      %p154 = scmp.ne.s32.totalorder %s140, %s141
      %p155 = scmp.eq.s32.totalorder %s17, 1
      %p156 = por %p154, %p155
      %p158 = scmp.ne.s32.totalorder %s141, %s157
      %p159 = scmp.eq.s32.totalorder %s17, 0
      %p160 = por %p158, %p159
      %p161 = scmp.le.s32.totalorder 1, %s11
      %p162 = scmp.lt.s32.totalorder %s11, 3
      %p163 = pnand %p161, %p162
      %p164 = pneg %p163
      // Predicated region
      $region9: #{tpu_custom_call.1} parent=5 // pred_check
        _
      $region10: #{tpu_custom_call.1} parent=5 // pred_check_branch
        %166 = sbr.rel (%p163) target = $region12
      $region11: #{tpu_custom_call.1} parent=5 // pred_region
        %s167 = ssub.s32 %s11, 1
        // Predicated region
        $region13: #{tpu_custom_call.1} parent=11 // pred_check
          %p168 = pneg %p75
        $region14: #{tpu_custom_call.1} parent=11 // pred_check_branch
          %170 = sbr.rel (%p168) target = $region16
        $region15: #{tpu_custom_call.1} parent=11 // pred_region
          %s171 = smul.u32 2, %s21
          %s173 = ssub.s32 4096, 4096
          %174 = vsyncadd [#allocation6], %s173
          %s175 = smul.addr %s171, 128
          %s176 = scalar_lea.hbm %s1, %s175
          %s177 = sshll.u32 [#allocation5], 4
          %s178 = int_to_ptr.vmem [resolvable:$true] %s177
          %183 = dma.hbm_to_vmem [thread:$0]  %s176, 4096, %s178, [#allocation6], 256, 256, 16
        $region16: #{tpu_custom_call.1} parent=11 // pred_fallthru
          _
        // Predicated region
        $region17: #{tpu_custom_call.1} parent=11 // pred_check
          %p184 = pneg %p101
        $region18: #{tpu_custom_call.1} parent=11 // pred_check_branch
          %186 = sbr.rel (%p184) target = $region20
        $region19: #{tpu_custom_call.1} parent=11 // pred_region
          %s187 = smul.u32 2, %s21
          %p188 = scmp.lt.s32.totalorder %s187, 1
          %s189 = scalar_select %p188, %s187, 1
          %s190 = scalar_lea.vmem %s2, %s189
          %s191 = smul.u32 2, %s21
        $region20: #{tpu_custom_call.1} parent=11 // pred_fallthru
          _
      $region12: #{tpu_custom_call.1} parent=5 // pred_fallthru
        _
      %p192 = scmp.lt.s32.totalorder %s11, 2
      // Predicated region
      $region21: #{tpu_custom_call.1} parent=5 // pred_check
        %p193 = pneg %p192
      $region22: #{tpu_custom_call.1} parent=5 // pred_check_branch
        %195 = sbr.rel (%p193) target = $region24
      $region23: #{tpu_custom_call.1} parent=5 // pred_region
        // Predicated region
        $region25: #{tpu_custom_call.1} parent=23 // pred_check
          %p196 = pneg %p43
        $region26: #{tpu_custom_call.1} parent=23 // pred_check_branch
          %198 = sbr.rel (%p196) target = $region28
        $region27: #{tpu_custom_call.1} parent=23 // pred_region
          %s199 = smul.u32 16, %s18
          %p200 = scmp.lt.s32.totalorder %s199, 31
          %s201 = scalar_select %p200, %s199, 31
          %s202 = smul.addr %s201, 8
          %s203 = scalar_lea.vmem %s0, %s202
          %s204 = smul.u32 16, %s18
        $region28: #{tpu_custom_call.1} parent=23 // pred_fallthru
          _
        // Predicated region
        $region29: #{tpu_custom_call.1} parent=23 // pred_check
          %p205 = pneg %p121
        $region30: #{tpu_custom_call.1} parent=23 // pred_check_branch
          %207 = sbr.rel (%p205) target = $region32
        $region31: #{tpu_custom_call.1} parent=23 // pred_region
          %s208 = smul.u32 16, %s18
          %p209 = scmp.lt.s32.totalorder %s208, 31
          %s210 = scalar_select %p209, %s208, 31
          %s211 = smul.addr %s210, 8
          %s212 = scalar_lea.vmem %s3, %s211
          %s213 = smul.u32 16, %s18
        $region32: #{tpu_custom_call.1} parent=23 // pred_fallthru
          _
      $region24: #{tpu_custom_call.1} parent=5 // pred_fallthru
        _
      %p214 = scmp.le.s32.totalorder 1, %s11
      %p215 = scmp.lt.s32.totalorder %s11, 3
      %p216 = pnand %p214, %p215
      %p217 = pneg %p216
      // Predicated region
      $region33: #{tpu_custom_call.1} parent=5 // pred_check
        _
      $region34: #{tpu_custom_call.1} parent=5 // pred_check_branch
        %219 = sbr.rel (%p216) target = $region36
      $region35: #{tpu_custom_call.1} parent=5 // pred_region
        %s220 = ssub.s32 %s11, 1
        // Predicated region
        $region37: #{tpu_custom_call.1} parent=35 // pred_check
          %p221 = pneg %p75
        $region38: #{tpu_custom_call.1} parent=35 // pred_check_branch
          %223 = sbr.rel (%p221) target = $region40
        $region39: #{tpu_custom_call.1} parent=35 // pred_region
          %224 = dma.done [#allocation6], 4096
        $region40: #{tpu_custom_call.1} parent=35 // pred_fallthru
          _
        %s225 = smul.u32 16, %s20
        %p226 = scmp.lt.s32.totalorder %s225, 31
        %s227 = scalar_select %p226, %s225, 31
        %s228 = smul.addr %s227, 8
        %s229 = scalar_lea.vmem %s0, %s228
        %p230 = pneg %p49
        %p231 = pneg %p46
        %p232 = pneg %p75
        %p233 = pneg %p72
        %s234 = smul.u32 2, %s21
        %p235 = scmp.lt.s32.totalorder %s234, 1
        %s236 = scalar_select %p235, %s234, 1
        %s237 = scalar_lea.vmem %s2, %s236
        %p238 = pneg %p101
        %p239 = pneg %p98
        %s240 = smul.u32 16, %s20
        %p241 = scmp.lt.s32.totalorder %s240, 31
        %s242 = scalar_select %p241, %s240, 31
        %s243 = smul.addr %s242, 8
        %s244 = scalar_lea.vmem %s3, %s243
        %p245 = pneg %p127
        %p246 = pneg %p124
        %p247 = pneg %p153
        %p248 = pneg %p150
        %s249 = smul.u32 16, %s20
        %p250 = scmp.lt.s32.totalorder %s249, 31
        %s251 = scalar_select %p250, %s249, 31
        %s252 = smul.addr %s251, 8
        %s253 = scalar_lea.vmem %s4, %s252
        %s254 = smul.u32 16, %s20
        %p255 = scmp.lt.s32.totalorder %s254, 31
        %s256 = scalar_select %p255, %s254, 31
        %s257 = smul.addr %s256, 8
        %s258 = scalar_lea.vmem %s0, %s257
        %s259 = smul.u32 16, %s20
        %s260 = smul.u32 2, %s21
        %s261 = smul.u32 2, %s21
        %p262 = scmp.lt.s32.totalorder %s261, 1
        %s263 = scalar_select %p262, %s261, 1
        %s264 = scalar_lea.vmem %s2, %s263
        %s265 = smul.u32 2, %s21
        %s266 = smul.u32 16, %s20
        %p267 = scmp.lt.s32.totalorder %s266, 31
        %s268 = scalar_select %p267, %s266, 31
        %s269 = smul.addr %s268, 8
        %s270 = scalar_lea.vmem %s3, %s269
        %s271 = smul.u32 16, %s20
        %s272 = smul.u32 16, %s20
        %p273 = scmp.lt.s32.totalorder %s272, 31
        %s274 = scalar_select %p273, %s272, 31
        %s275 = smul.addr %s274, 8
        %s276 = scalar_lea.vmem %s4, %s275
        %s277 = smul.u32 16, %s20
        %p278 = scmp.eq.s32.totalorder %s21, 0
        // Predicated region
        $region41: #{tpu_custom_call.1} parent=35 // pred_check
          %p279 = pneg %p278
        $region42: #{tpu_custom_call.1} parent=35 // pred_check_branch
          %281 = sbr.rel (%p279) target = $region44
        $region43: #{tpu_custom_call.1} parent=35 // pred_region
          %vm282 = vcmask 7168
          %283 = vst.msk [vmem:[#allocation2] sm:$0xff] %vm282, -9e+15
          %284 = vst.msk [vmem:[#allocation2 + $0x8] sm:$0xff] %vm282, -9e+15
          %285 = vst.msk [vmem:[#allocation2 + $0x10] sm:$0xff] %vm282, -9e+15
          %286 = vst.msk [vmem:[#allocation2 + $0x18] sm:$0xff] %vm282, -9e+15
          %287 = vst.msk [vmem:[#allocation2 + $0x20] sm:$0xff] %vm282, -9e+15
          %288 = vst.msk [vmem:[#allocation2 + $0x28] sm:$0xff] %vm282, -9e+15
          %289 = vst.msk [vmem:[#allocation2 + $0x30] sm:$0xff] %vm282, -9e+15
          %290 = vst.msk [vmem:[#allocation2 + $0x38] sm:$0xff] %vm282, -9e+15
          %291 = vst.msk [vmem:[#allocation2 + $0x40] sm:$0xff] %vm282, -9e+15
          %292 = vst.msk [vmem:[#allocation2 + $0x48] sm:$0xff] %vm282, -9e+15
          %293 = vst.msk [vmem:[#allocation2 + $0x50] sm:$0xff] %vm282, -9e+15
          %294 = vst.msk [vmem:[#allocation2 + $0x58] sm:$0xff] %vm282, -9e+15
          %295 = vst.msk [vmem:[#allocation2 + $0x60] sm:$0xff] %vm282, -9e+15
          %296 = vst.msk [vmem:[#allocation2 + $0x68] sm:$0xff] %vm282, -9e+15
          %297 = vst.msk [vmem:[#allocation2 + $0x70] sm:$0xff] %vm282, -9e+15
          %298 = vst.msk [vmem:[#allocation2 + $0x78] sm:$0xff] %vm282, -9e+15
          %299 = vst.msk [vmem:[#allocation3] sm:$0xff] %vm282, 0.0
          %300 = vst.msk [vmem:[#allocation3 + $0x8] sm:$0xff] %vm282, 0.0
          %301 = vst.msk [vmem:[#allocation3 + $0x10] sm:$0xff] %vm282, 0.0
          %302 = vst.msk [vmem:[#allocation3 + $0x18] sm:$0xff] %vm282, 0.0
          %303 = vst.msk [vmem:[#allocation3 + $0x20] sm:$0xff] %vm282, 0.0
          %304 = vst.msk [vmem:[#allocation3 + $0x28] sm:$0xff] %vm282, 0.0
          %305 = vst.msk [vmem:[#allocation3 + $0x30] sm:$0xff] %vm282, 0.0
          %306 = vst.msk [vmem:[#allocation3 + $0x38] sm:$0xff] %vm282, 0.0
          %307 = vst.msk [vmem:[#allocation3 + $0x40] sm:$0xff] %vm282, 0.0
          %308 = vst.msk [vmem:[#allocation3 + $0x48] sm:$0xff] %vm282, 0.0
          %309 = vst.msk [vmem:[#allocation3 + $0x50] sm:$0xff] %vm282, 0.0
          %310 = vst.msk [vmem:[#allocation3 + $0x58] sm:$0xff] %vm282, 0.0
          %311 = vst.msk [vmem:[#allocation3 + $0x60] sm:$0xff] %vm282, 0.0
          %312 = vst.msk [vmem:[#allocation3 + $0x68] sm:$0xff] %vm282, 0.0
          %313 = vst.msk [vmem:[#allocation3 + $0x70] sm:$0xff] %vm282, 0.0
          %314 = vst.msk [vmem:[#allocation3 + $0x78] sm:$0xff] %vm282, 0.0
          %v315 = vlaneseq
          %v316 = vand.u32 %v315, 127
          %v317 = vadd.s32 %v316, 128
          %v318 = vlaneseq
          %v319 = vshrl.u32 %v318, 7
          %v320 = vadd.s32 %v319, 8
          %v321 = vadd.s32 %v319, 16
          %v322 = vadd.s32 %v319, 24
          %v323 = vadd.s32 %v319, 32
          %v324 = vadd.s32 %v319, 40
          %v325 = vadd.s32 %v319, 48
          %v326 = vadd.s32 %v319, 56
          %v327 = vadd.s32 %v319, 64
          %v328 = vadd.s32 %v319, 72
          %v329 = vadd.s32 %v319, 80
          %v330 = vadd.s32 %v319, 88
          %v331 = vadd.s32 %v319, 96
          %v332 = vadd.s32 %v319, 104
          %v333 = vadd.s32 %v319, 112
          %v334 = vadd.s32 %v319, 120
          %v335 = vsub.s32 %v316, %v319
          %v336 = vsub.s32 %v317, %v319
          %v337 = vsub.s32 %v316, %v320
          %v338 = vsub.s32 %v317, %v320
          %v339 = vsub.s32 %v316, %v321
          %v340 = vsub.s32 %v317, %v321
          %v341 = vsub.s32 %v316, %v322
          %v342 = vsub.s32 %v317, %v322
          %v343 = vsub.s32 %v316, %v323
          %v344 = vsub.s32 %v317, %v323
          %v345 = vsub.s32 %v316, %v324
          %v346 = vsub.s32 %v317, %v324
          %v347 = vsub.s32 %v316, %v325
          %v348 = vsub.s32 %v317, %v325
          %v349 = vsub.s32 %v316, %v326
          %v350 = vsub.s32 %v317, %v326
          %v351 = vsub.s32 %v316, %v327
          %v352 = vsub.s32 %v317, %v327
          %v353 = vsub.s32 %v316, %v328
          %v354 = vsub.s32 %v317, %v328
          %v355 = vsub.s32 %v316, %v329
          %v356 = vsub.s32 %v317, %v329
          %v357 = vsub.s32 %v316, %v330
          %v358 = vsub.s32 %v317, %v330
          %v359 = vsub.s32 %v316, %v331
          %v360 = vsub.s32 %v317, %v331
          %v361 = vsub.s32 %v316, %v332
          %v362 = vsub.s32 %v317, %v332
          %v363 = vsub.s32 %v316, %v333
          %v364 = vsub.s32 %v317, %v333
          %v365 = vsub.s32 %v316, %v334
          %v366 = vsub.s32 %v317, %v334
          %367 = vst [vmem:[#allocation4] sm:$0xff] %v335
          %368 = vst [vmem:[#allocation4 + $0x8] sm:$0xff] %v336
          %369 = vst [vmem:[#allocation4 + $0x10] sm:$0xff] %v337
          %370 = vst [vmem:[#allocation4 + $0x18] sm:$0xff] %v338
          %371 = vst [vmem:[#allocation4 + $0x20] sm:$0xff] %v339
          %372 = vst [vmem:[#allocation4 + $0x28] sm:$0xff] %v340
          %373 = vst [vmem:[#allocation4 + $0x30] sm:$0xff] %v341
          %374 = vst [vmem:[#allocation4 + $0x38] sm:$0xff] %v342
          %375 = vst [vmem:[#allocation4 + $0x40] sm:$0xff] %v343
          %376 = vst [vmem:[#allocation4 + $0x48] sm:$0xff] %v344
          %377 = vst [vmem:[#allocation4 + $0x50] sm:$0xff] %v345
          %378 = vst [vmem:[#allocation4 + $0x58] sm:$0xff] %v346
          %379 = vst [vmem:[#allocation4 + $0x60] sm:$0xff] %v347
          %380 = vst [vmem:[#allocation4 + $0x68] sm:$0xff] %v348
          %381 = vst [vmem:[#allocation4 + $0x70] sm:$0xff] %v349
          %382 = vst [vmem:[#allocation4 + $0x78] sm:$0xff] %v350
          %383 = vst [vmem:[#allocation4 + $0x80] sm:$0xff] %v351
          %384 = vst [vmem:[#allocation4 + $0x88] sm:$0xff] %v352
          %385 = vst [vmem:[#allocation4 + $0x90] sm:$0xff] %v353
          %386 = vst [vmem:[#allocation4 + $0x98] sm:$0xff] %v354
          %387 = vst [vmem:[#allocation4 + $0xa0] sm:$0xff] %v355
          %388 = vst [vmem:[#allocation4 + $0xa8] sm:$0xff] %v356
          %389 = vst [vmem:[#allocation4 + $0xb0] sm:$0xff] %v357
          %390 = vst [vmem:[#allocation4 + $0xb8] sm:$0xff] %v358
          %391 = vst [vmem:[#allocation4 + $0xc0] sm:$0xff] %v359
          %392 = vst [vmem:[#allocation4 + $0xc8] sm:$0xff] %v360
          %393 = vst [vmem:[#allocation4 + $0xd0] sm:$0xff] %v361
          %394 = vst [vmem:[#allocation4 + $0xd8] sm:$0xff] %v362
          %395 = vst [vmem:[#allocation4 + $0xe0] sm:$0xff] %v363
          %396 = vst [vmem:[#allocation4 + $0xe8] sm:$0xff] %v364
          %397 = vst [vmem:[#allocation4 + $0xf0] sm:$0xff] %v365
          %398 = vst [vmem:[#allocation4 + $0xf8] sm:$0xff] %v366
        $region44: #{tpu_custom_call.1} parent=35 // pred_fallthru
          _
        %v399 = vld [vmem:[%s258] sm:$0xff]
        %v400 = vld [vmem:[%s258 + $0x8] sm:$0xff]
        %v401 = vld [vmem:[%s258 + $0x10] sm:$0xff]
        %v402 = vld [vmem:[%s258 + $0x18] sm:$0xff]
        %v403 = vld [vmem:[%s258 + $0x20] sm:$0xff]
        %v404 = vld [vmem:[%s258 + $0x28] sm:$0xff]
        %v405 = vld [vmem:[%s258 + $0x30] sm:$0xff]
        %v406 = vld [vmem:[%s258 + $0x38] sm:$0xff]
        %v407 = vld [vmem:[%s258 + $0x40] sm:$0xff]
        %v408 = vld [vmem:[%s258 + $0x48] sm:$0xff]
        %v409 = vld [vmem:[%s258 + $0x50] sm:$0xff]
        %v410 = vld [vmem:[%s258 + $0x58] sm:$0xff]
        %v411 = vld [vmem:[%s258 + $0x60] sm:$0xff]
        %v412 = vld [vmem:[%s258 + $0x68] sm:$0xff]
        %v413 = vld [vmem:[%s258 + $0x70] sm:$0xff]
        %v414 = vld [vmem:[%s258 + $0x78] sm:$0xff]
        %v415 = vld [vmem:[#allocation5] sm:$0xff]
        %v416 = vld [vmem:[#allocation5 + $0x8] sm:$0xff]
        %v417 = vld [vmem:[#allocation5 + $0x10] sm:$0xff]
        %v418 = vld [vmem:[#allocation5 + $0x18] sm:$0xff]
        %v419 = vld [vmem:[#allocation5 + $0x20] sm:$0xff]
        %v420 = vld [vmem:[#allocation5 + $0x28] sm:$0xff]
        %v421 = vld [vmem:[#allocation5 + $0x30] sm:$0xff]
        %v422 = vld [vmem:[#allocation5 + $0x38] sm:$0xff]
        %v423 = vld [vmem:[#allocation5 + $0x40] sm:$0xff]
        %v424 = vld [vmem:[#allocation5 + $0x48] sm:$0xff]
        %v425 = vld [vmem:[#allocation5 + $0x50] sm:$0xff]
        %v426 = vld [vmem:[#allocation5 + $0x58] sm:$0xff]
        %v427 = vld [vmem:[#allocation5 + $0x60] sm:$0xff]
        %v428 = vld [vmem:[#allocation5 + $0x68] sm:$0xff]
        %v429 = vld [vmem:[#allocation5 + $0x70] sm:$0xff]
        %v430 = vld [vmem:[#allocation5 + $0x78] sm:$0xff]
        %v431 = vld [vmem:[#allocation5 + $0x80] sm:$0xff]
        %v432 = vld [vmem:[#allocation5 + $0x88] sm:$0xff]
        %v433 = vld [vmem:[#allocation5 + $0x90] sm:$0xff]
        %v434 = vld [vmem:[#allocation5 + $0x98] sm:$0xff]
        %v435 = vld [vmem:[#allocation5 + $0xa0] sm:$0xff]
        %v436 = vld [vmem:[#allocation5 + $0xa8] sm:$0xff]
        %v437 = vld [vmem:[#allocation5 + $0xb0] sm:$0xff]
        %v438 = vld [vmem:[#allocation5 + $0xb8] sm:$0xff]
        %v439 = vld [vmem:[#allocation5 + $0xc0] sm:$0xff]
        %v440 = vld [vmem:[#allocation5 + $0xc8] sm:$0xff]
        %v441 = vld [vmem:[#allocation5 + $0xd0] sm:$0xff]
        %v442 = vld [vmem:[#allocation5 + $0xd8] sm:$0xff]
        %v443 = vld [vmem:[#allocation5 + $0xe0] sm:$0xff]
        %v444 = vld [vmem:[#allocation5 + $0xe8] sm:$0xff]
        %v445 = vld [vmem:[#allocation5 + $0xf0] sm:$0xff]
        %v446 = vld [vmem:[#allocation5 + $0xf8] sm:$0xff]
        %v447 = vld [vmem:[%s264] sm:$0x3]
        %v449 = vlaneseq
        %v450 = vshrl.u32 %v449, 7
        %v451 = vsub.s32 0, %v450
        %v452 = vrot.slane %v447, %v451
        %v453 = vlaneseq
        %v454 = vshrl.u32 %v453, 7
        %v455 = vsub.s32 1, %v454
        %v456 = vrot.slane %v447, %v455
        %459 = vmatprep.subr.mxu0 %v416
        %460 = vmatpush1.msra.mxu0 %v415
        %461 = vmatprep.subr.mxu0 %v418
        %462 = vmatpush1.msra.mxu0 %v417
        %463 = vmatprep.subr.mxu0 %v420
        %464 = vmatpush1.msra.mxu0 %v419
        %465 = vmatprep.subr.mxu0 %v422
        %466 = vmatpush1.msra.mxu0 %v421
        %467 = vmatprep.subr.mxu0 %v424
        %468 = vmatpush1.msra.mxu0 %v423
        %469 = vmatprep.subr.mxu0 %v426
        %470 = vmatpush1.msra.mxu0 %v425
        %471 = vmatprep.subr.mxu0 %v428
        %472 = vmatpush1.msra.mxu0 %v427
        %473 = vmatprep.subr.mxu0 %v430
        %474 = vmatpush1.msra.mxu0 %v429
        %475 = vmatprep.subr.mxu0 %v432
        %476 = vmatpush1.msra.mxu0 %v431
        %477 = vmatprep.subr.mxu0 %v434
        %478 = vmatpush1.msra.mxu0 %v433
        %479 = vmatprep.subr.mxu0 %v436
        %480 = vmatpush1.msra.mxu0 %v435
        %481 = vmatprep.subr.mxu0 %v438
        %482 = vmatpush1.msra.mxu0 %v437
        %483 = vmatprep.subr.mxu0 %v440
        %484 = vmatpush1.msra.mxu0 %v439
        %485 = vmatprep.subr.mxu0 %v442
        %486 = vmatpush1.msra.mxu0 %v441
        %487 = vmatprep.subr.mxu0 %v444
        %488 = vmatpush1.msra.mxu0 %v443
        %489 = vmatprep.subr.mxu0 %v446
        %490 = vmatpush1.msra.mxu0 %v445
        %491 = vmatprep.subr.mxu0 0.0
        %492 = vmatpush1.msra.mxu0 0.0
        %493 = vmatprep.subr.mxu0 0.0
        %494 = vmatpush1.msra.mxu0 0.0
        %495 = vmatprep.subr.mxu0 0.0
        %496 = vmatpush1.msra.mxu0 0.0
        %497 = vmatprep.subr.mxu0 0.0
        %498 = vmatpush1.msra.mxu0 0.0
        %499 = vmatprep.subr.mxu0 0.0
        %500 = vmatpush1.msra.mxu0 0.0
        %501 = vmatprep.subr.mxu0 0.0
        %502 = vmatpush1.msra.mxu0 0.0
        %503 = vmatprep.subr.mxu0 0.0
        %504 = vmatpush1.msra.mxu0 0.0
        %505 = vmatprep.subr.mxu0 0.0
        %506 = vmatpush1.msra.mxu0 0.0
        %507 = vmatprep.subr.mxu0 0.0
        %508 = vmatpush1.msra.mxu0 0.0
        %509 = vmatprep.subr.mxu0 0.0
        %510 = vmatpush1.msra.mxu0 0.0
        %511 = vmatprep.subr.mxu0 0.0
        %512 = vmatpush1.msra.mxu0 0.0
        %513 = vmatprep.subr.mxu0 0.0
        %514 = vmatpush1.msra.mxu0 0.0
        %515 = vmatprep.subr.mxu0 0.0
        %516 = vmatpush1.msra.mxu0 0.0
        %517 = vmatprep.subr.mxu0 0.0
        %518 = vmatpush1.msra.mxu0 0.0
        %519 = vmatprep.subr.mxu0 0.0
        %520 = vmatpush1.msra.mxu0 0.0
        %521 = vmatprep.subr.mxu0 0.0
        %522 = vmatpush1.msra.mxu0 0.0
        %523 = vmatprep.mubr.f32.mxu0 0.0
        %524 = vmatmul.mubr.f32.gmra.mrb[0].mxu0 %v399
        %v525 = vpop.f32.mrb[0].mxu0
        %v526 = vadd.f32 %v452, %v525
        %v527 = vpop.f32.mrb[0].mxu0
        %v528 = vadd.f32 %v456, %v527
        %529 = vmatprep.mubr.f32.mxu0 0.0
        %530 = vmatmul.mubr.f32.gmra.mrb[0].mxu0 %v400
        %v531 = vpop.f32.mrb[0].mxu0
        %v532 = vadd.f32 %v452, %v531
        %v533 = vpop.f32.mrb[0].mxu0
        %v534 = vadd.f32 %v456, %v533
        %535 = vmatprep.mubr.f32.mxu0 0.0
        %536 = vmatmul.mubr.f32.gmra.mrb[0].mxu0 %v401
        %v537 = vpop.f32.mrb[0].mxu0
        %v538 = vadd.f32 %v452, %v537
        %v539 = vpop.f32.mrb[0].mxu0
        %v540 = vadd.f32 %v456, %v539
        %541 = vmatprep.mubr.f32.mxu0 0.0
        %542 = vmatmul.mubr.f32.gmra.mrb[0].mxu0 %v402
        %v543 = vpop.f32.mrb[0].mxu0
        %v544 = vadd.f32 %v452, %v543
        %v545 = vpop.f32.mrb[0].mxu0
        %v546 = vadd.f32 %v456, %v545
        %547 = vmatprep.mubr.f32.mxu0 0.0
        %548 = vmatmul.mubr.f32.gmra.mrb[0].mxu0 %v403
        %v549 = vpop.f32.mrb[0].mxu0
        %v550 = vadd.f32 %v452, %v549
        %v551 = vpop.f32.mrb[0].mxu0
        %v552 = vadd.f32 %v456, %v551
        %553 = vmatprep.mubr.f32.mxu0 0.0
        %554 = vmatmul.mubr.f32.gmra.mrb[0].mxu0 %v404
        %v555 = vpop.f32.mrb[0].mxu0
        %v556 = vadd.f32 %v452, %v555
        %v557 = vpop.f32.mrb[0].mxu0
        %v558 = vadd.f32 %v456, %v557
        %559 = vmatprep.mubr.f32.mxu0 0.0
        %560 = vmatmul.mubr.f32.gmra.mrb[0].mxu0 %v405
        %v561 = vpop.f32.mrb[0].mxu0
        %v562 = vadd.f32 %v452, %v561
        %v563 = vpop.f32.mrb[0].mxu0
        %v564 = vadd.f32 %v456, %v563
        %565 = vmatprep.mubr.f32.mxu0 0.0
        %566 = vmatmul.mubr.f32.gmra.mrb[0].mxu0 %v406
        %v567 = vpop.f32.mrb[0].mxu0
        %v568 = vadd.f32 %v452, %v567
        %v569 = vpop.f32.mrb[0].mxu0
        %v570 = vadd.f32 %v456, %v569
        %571 = vmatprep.mubr.f32.mxu0 0.0
        %572 = vmatmul.mubr.f32.gmra.mrb[0].mxu0 %v407
        %v573 = vpop.f32.mrb[0].mxu0
        %v574 = vadd.f32 %v452, %v573
        %v575 = vpop.f32.mrb[0].mxu0
        %v576 = vadd.f32 %v456, %v575
        %577 = vmatprep.mubr.f32.mxu0 0.0
        %578 = vmatmul.mubr.f32.gmra.mrb[0].mxu0 %v408
        %v579 = vpop.f32.mrb[0].mxu0
        %v580 = vadd.f32 %v452, %v579
        %v581 = vpop.f32.mrb[0].mxu0
        %v582 = vadd.f32 %v456, %v581
        %583 = vmatprep.mubr.f32.mxu0 0.0
        %584 = vmatmul.mubr.f32.gmra.mrb[0].mxu0 %v409
        %v585 = vpop.f32.mrb[0].mxu0
        %v586 = vadd.f32 %v452, %v585
        %v587 = vpop.f32.mrb[0].mxu0
        %v588 = vadd.f32 %v456, %v587
        %589 = vmatprep.mubr.f32.mxu0 0.0
        %590 = vmatmul.mubr.f32.gmra.mrb[0].mxu0 %v410
        %v591 = vpop.f32.mrb[0].mxu0
        %v592 = vadd.f32 %v452, %v591
        %v593 = vpop.f32.mrb[0].mxu0
        %v594 = vadd.f32 %v456, %v593
        %595 = vmatprep.mubr.f32.mxu0 0.0
        %596 = vmatmul.mubr.f32.gmra.mrb[0].mxu0 %v411
        %v597 = vpop.f32.mrb[0].mxu0
        %v598 = vadd.f32 %v452, %v597
        %v599 = vpop.f32.mrb[0].mxu0
        %v600 = vadd.f32 %v456, %v599
        %601 = vmatprep.mubr.f32.mxu0 0.0
        %602 = vmatmul.mubr.f32.gmra.mrb[0].mxu0 %v412
        %v603 = vpop.f32.mrb[0].mxu0
        %v604 = vadd.f32 %v452, %v603
        %v605 = vpop.f32.mrb[0].mxu0
        %v606 = vadd.f32 %v456, %v605
        %607 = vmatprep.mubr.f32.mxu0 0.0
        %608 = vmatmul.mubr.f32.gmra.mrb[0].mxu0 %v413
        %v609 = vpop.f32.mrb[0].mxu0
        %v610 = vadd.f32 %v452, %v609
        %v611 = vpop.f32.mrb[0].mxu0
        %v612 = vadd.f32 %v456, %v611
        %613 = vmatprep.mubr.f32.mxu0 0.0
        %614 = vmatmul.mubr.f32.gmra.mrb[0].mxu0 %v414
        %v615 = vpop.f32.mrb[0].mxu0
        %v616 = vadd.f32 %v452, %v615
        %v617 = vpop.f32.mrb[0].mxu0
        %v618 = vadd.f32 %v456, %v617
        %619 = vdwg.mxu0
        %v620 = vld [vmem:[#allocation4] sm:$0xff]
        %v621 = vld [vmem:[#allocation4 + $0x8] sm:$0xff]
        %v622 = vld [vmem:[#allocation4 + $0x10] sm:$0xff]
        %v623 = vld [vmem:[#allocation4 + $0x18] sm:$0xff]
        %v624 = vld [vmem:[#allocation4 + $0x20] sm:$0xff]
        %v625 = vld [vmem:[#allocation4 + $0x28] sm:$0xff]
        %v626 = vld [vmem:[#allocation4 + $0x30] sm:$0xff]
        %v627 = vld [vmem:[#allocation4 + $0x38] sm:$0xff]
        %v628 = vld [vmem:[#allocation4 + $0x40] sm:$0xff]
        %v629 = vld [vmem:[#allocation4 + $0x48] sm:$0xff]
        %v630 = vld [vmem:[#allocation4 + $0x50] sm:$0xff]
        %v631 = vld [vmem:[#allocation4 + $0x58] sm:$0xff]
        %v632 = vld [vmem:[#allocation4 + $0x60] sm:$0xff]
        %v633 = vld [vmem:[#allocation4 + $0x68] sm:$0xff]
        %v634 = vld [vmem:[#allocation4 + $0x70] sm:$0xff]
        %v635 = vld [vmem:[#allocation4 + $0x78] sm:$0xff]
        %v636 = vld [vmem:[#allocation4 + $0x80] sm:$0xff]
        %v637 = vld [vmem:[#allocation4 + $0x88] sm:$0xff]
        %v638 = vld [vmem:[#allocation4 + $0x90] sm:$0xff]
        %v639 = vld [vmem:[#allocation4 + $0x98] sm:$0xff]
        %v640 = vld [vmem:[#allocation4 + $0xa0] sm:$0xff]
        %v641 = vld [vmem:[#allocation4 + $0xa8] sm:$0xff]
        %v642 = vld [vmem:[#allocation4 + $0xb0] sm:$0xff]
        %v643 = vld [vmem:[#allocation4 + $0xb8] sm:$0xff]
        %v644 = vld [vmem:[#allocation4 + $0xc0] sm:$0xff]
        %v645 = vld [vmem:[#allocation4 + $0xc8] sm:$0xff]
        %v646 = vld [vmem:[#allocation4 + $0xd0] sm:$0xff]
        %v647 = vld [vmem:[#allocation4 + $0xd8] sm:$0xff]
        %v648 = vld [vmem:[#allocation4 + $0xe0] sm:$0xff]
        %v649 = vld [vmem:[#allocation4 + $0xe8] sm:$0xff]
        %v650 = vld [vmem:[#allocation4 + $0xf0] sm:$0xff]
        %v651 = vld [vmem:[#allocation4 + $0xf8] sm:$0xff]
        %s652 = smul.u32 %s20, 128
        %s653 = smul.u32 %s21, 256
        %s654 = ssub.s32 %s652, %s653
        %v655 = vstv %s654
        %vm656 = vcmp.eq.s32.totalorder %v620, %v655
        %vm657 = vcmp.eq.s32.totalorder %v621, %v655
        %vm658 = vcmp.eq.s32.totalorder %v622, %v655
        %vm659 = vcmp.eq.s32.totalorder %v623, %v655
        %vm660 = vcmp.eq.s32.totalorder %v624, %v655
        %vm661 = vcmp.eq.s32.totalorder %v625, %v655
        %vm662 = vcmp.eq.s32.totalorder %v626, %v655
        %vm663 = vcmp.eq.s32.totalorder %v627, %v655
        %vm664 = vcmp.eq.s32.totalorder %v628, %v655
        %vm665 = vcmp.eq.s32.totalorder %v629, %v655
        %vm666 = vcmp.eq.s32.totalorder %v630, %v655
        %vm667 = vcmp.eq.s32.totalorder %v631, %v655
        %vm668 = vcmp.eq.s32.totalorder %v632, %v655
        %vm669 = vcmp.eq.s32.totalorder %v633, %v655
        %vm670 = vcmp.eq.s32.totalorder %v634, %v655
        %vm671 = vcmp.eq.s32.totalorder %v635, %v655
        %vm672 = vcmp.eq.s32.totalorder %v636, %v655
        %vm673 = vcmp.eq.s32.totalorder %v637, %v655
        %vm674 = vcmp.eq.s32.totalorder %v638, %v655
        %vm675 = vcmp.eq.s32.totalorder %v639, %v655
        %vm676 = vcmp.eq.s32.totalorder %v640, %v655
        %vm677 = vcmp.eq.s32.totalorder %v641, %v655
        %vm678 = vcmp.eq.s32.totalorder %v642, %v655
        %vm679 = vcmp.eq.s32.totalorder %v643, %v655
        %vm680 = vcmp.eq.s32.totalorder %v644, %v655
        %vm681 = vcmp.eq.s32.totalorder %v645, %v655
        %vm682 = vcmp.eq.s32.totalorder %v646, %v655
        %vm683 = vcmp.eq.s32.totalorder %v647, %v655
        %vm684 = vcmp.eq.s32.totalorder %v648, %v655
        %vm685 = vcmp.eq.s32.totalorder %v649, %v655
        %vm686 = vcmp.eq.s32.totalorder %v650, %v655
        %vm687 = vcmp.eq.s32.totalorder %v651, %v655
        %v688 = vsel %vm656, -9e+15, %v526
        %v689 = vsel %vm657, -9e+15, %v528
        %v690 = vsel %vm658, -9e+15, %v532
        %v691 = vsel %vm659, -9e+15, %v534
        %v692 = vsel %vm660, -9e+15, %v538
        %v693 = vsel %vm661, -9e+15, %v540
        %v694 = vsel %vm662, -9e+15, %v544
        %v695 = vsel %vm663, -9e+15, %v546
        %v696 = vsel %vm664, -9e+15, %v550
        %v697 = vsel %vm665, -9e+15, %v552
        %v698 = vsel %vm666, -9e+15, %v556
        %v699 = vsel %vm667, -9e+15, %v558
        %v700 = vsel %vm668, -9e+15, %v562
        %v701 = vsel %vm669, -9e+15, %v564
        %v702 = vsel %vm670, -9e+15, %v568
        %v703 = vsel %vm671, -9e+15, %v570
        %v704 = vsel %vm672, -9e+15, %v574
        %v705 = vsel %vm673, -9e+15, %v576
        %v706 = vsel %vm674, -9e+15, %v580
        %v707 = vsel %vm675, -9e+15, %v582
        %v708 = vsel %vm676, -9e+15, %v586
        %v709 = vsel %vm677, -9e+15, %v588
        %v710 = vsel %vm678, -9e+15, %v592
        %v711 = vsel %vm679, -9e+15, %v594
        %v712 = vsel %vm680, -9e+15, %v598
        %v713 = vsel %vm681, -9e+15, %v600
        %v714 = vsel %vm682, -9e+15, %v604
        %v715 = vsel %vm683, -9e+15, %v606
        %v716 = vsel %vm684, -9e+15, %v610
        %v717 = vsel %vm685, -9e+15, %v612
        %v718 = vsel %vm686, -9e+15, %v616
        %v719 = vsel %vm687, -9e+15, %v618
        %v720 = vld [vmem:[#allocation2] sm:$0xff]
        %v721 = vld [vmem:[#allocation2 + $0x8] sm:$0xff]
        %v722 = vld [vmem:[#allocation2 + $0x10] sm:$0xff]
        %v723 = vld [vmem:[#allocation2 + $0x18] sm:$0xff]
        %v724 = vld [vmem:[#allocation2 + $0x20] sm:$0xff]
        %v725 = vld [vmem:[#allocation2 + $0x28] sm:$0xff]
        %v726 = vld [vmem:[#allocation2 + $0x30] sm:$0xff]
        %v727 = vld [vmem:[#allocation2 + $0x38] sm:$0xff]
        %v728 = vld [vmem:[#allocation2 + $0x40] sm:$0xff]
        %v729 = vld [vmem:[#allocation2 + $0x48] sm:$0xff]
        %v730 = vld [vmem:[#allocation2 + $0x50] sm:$0xff]
        %v731 = vld [vmem:[#allocation2 + $0x58] sm:$0xff]
        %v732 = vld [vmem:[#allocation2 + $0x60] sm:$0xff]
        %v733 = vld [vmem:[#allocation2 + $0x68] sm:$0xff]
        %v734 = vld [vmem:[#allocation2 + $0x70] sm:$0xff]
        %v735 = vld [vmem:[#allocation2 + $0x78] sm:$0xff]
        %v736 = vmax.f32 %v688, %v689
        %737 = vmax.xlane.f32.xlu0 %v736
        %v738 = vpop.xlane.xlu0 %737
        %v739 = vmax.f32 %v690, %v691
        %740 = vmax.xlane.f32.xlu0 %v739
        %v741 = vpop.xlane.xlu0 %740
        %v742 = vmax.f32 %v692, %v693
        %743 = vmax.xlane.f32.xlu0 %v742
        %v744 = vpop.xlane.xlu0 %743
        %v745 = vmax.f32 %v694, %v695
        %746 = vmax.xlane.f32.xlu0 %v745
        %v747 = vpop.xlane.xlu0 %746
        %v748 = vmax.f32 %v696, %v697
        %749 = vmax.xlane.f32.xlu0 %v748
        %v750 = vpop.xlane.xlu0 %749
        %v751 = vmax.f32 %v698, %v699
        %752 = vmax.xlane.f32.xlu0 %v751
        %v753 = vpop.xlane.xlu0 %752
        %v754 = vmax.f32 %v700, %v701
        %755 = vmax.xlane.f32.xlu0 %v754
        %v756 = vpop.xlane.xlu0 %755
        %v757 = vmax.f32 %v702, %v703
        %758 = vmax.xlane.f32.xlu0 %v757
        %v759 = vpop.xlane.xlu0 %758
        %v760 = vmax.f32 %v704, %v705
        %761 = vmax.xlane.f32.xlu0 %v760
        %v762 = vpop.xlane.xlu0 %761
        %v763 = vmax.f32 %v706, %v707
        %764 = vmax.xlane.f32.xlu0 %v763
        %v765 = vpop.xlane.xlu0 %764
        %v766 = vmax.f32 %v708, %v709
        %767 = vmax.xlane.f32.xlu0 %v766
        %v768 = vpop.xlane.xlu0 %767
        %v769 = vmax.f32 %v710, %v711
        %770 = vmax.xlane.f32.xlu0 %v769
        %v771 = vpop.xlane.xlu0 %770
        %v772 = vmax.f32 %v712, %v713
        %773 = vmax.xlane.f32.xlu0 %v772
        %v774 = vpop.xlane.xlu0 %773
        %v775 = vmax.f32 %v714, %v715
        %776 = vmax.xlane.f32.xlu0 %v775
        %v777 = vpop.xlane.xlu0 %776
        %v778 = vmax.f32 %v716, %v717
        %779 = vmax.xlane.f32.xlu0 %v778
        %v780 = vpop.xlane.xlu0 %779
        %v781 = vmax.f32 %v718, %v719
        %782 = vmax.xlane.f32.xlu0 %v781
        %v783 = vpop.xlane.xlu0 %782
        %v784 = vmax.f32 %v720, %v738
        %v785 = vmax.f32 %v721, %v741
        %v786 = vmax.f32 %v722, %v744
        %v787 = vmax.f32 %v723, %v747
        %v788 = vmax.f32 %v724, %v750
        %v789 = vmax.f32 %v725, %v753
        %v790 = vmax.f32 %v726, %v756
        %v791 = vmax.f32 %v727, %v759
        %v792 = vmax.f32 %v728, %v762
        %v793 = vmax.f32 %v729, %v765
        %v794 = vmax.f32 %v730, %v768
        %v795 = vmax.f32 %v731, %v771
        %v796 = vmax.f32 %v732, %v774
        %v797 = vmax.f32 %v733, %v777
        %v798 = vmax.f32 %v734, %v780
        %v799 = vmax.f32 %v735, %v783
        %v800 = vsub.f32 %v720, %v784
        %v801 = vsub.f32 %v721, %v785
        %v802 = vsub.f32 %v722, %v786
        %v803 = vsub.f32 %v723, %v787
        %v804 = vsub.f32 %v724, %v788
        %v805 = vsub.f32 %v725, %v789
        %v806 = vsub.f32 %v726, %v790
        %v807 = vsub.f32 %v727, %v791
        %v808 = vsub.f32 %v728, %v792
        %v809 = vsub.f32 %v729, %v793
        %v810 = vsub.f32 %v730, %v794
        %v811 = vsub.f32 %v731, %v795
        %v812 = vsub.f32 %v732, %v796
        %v813 = vsub.f32 %v733, %v797
        %v814 = vsub.f32 %v734, %v798
        %v815 = vsub.f32 %v735, %v799
        %v816 = vmul.f32 %v800, 1.442695
        %v817 = vpow.pop %v816
        %v818 = vmul.f32 %v801, 1.442695
        %v819 = vpow.pop %v818
        %v820 = vmul.f32 %v802, 1.442695
        %v821 = vpow.pop %v820
        %v822 = vmul.f32 %v803, 1.442695
        %v823 = vpow.pop %v822
        %v824 = vmul.f32 %v804, 1.442695
        %v825 = vpow.pop %v824
        %v826 = vmul.f32 %v805, 1.442695
        %v827 = vpow.pop %v826
        %v828 = vmul.f32 %v806, 1.442695
        %v829 = vpow.pop %v828
        %v830 = vmul.f32 %v807, 1.442695
        %v831 = vpow.pop %v830
        %v832 = vmul.f32 %v808, 1.442695
        %v833 = vpow.pop %v832
        %v834 = vmul.f32 %v809, 1.442695
        %v835 = vpow.pop %v834
        %v836 = vmul.f32 %v810, 1.442695
        %v837 = vpow.pop %v836
        %v838 = vmul.f32 %v811, 1.442695
        %v839 = vpow.pop %v838
        %v840 = vmul.f32 %v812, 1.442695
        %v841 = vpow.pop %v840
        %v842 = vmul.f32 %v813, 1.442695
        %v843 = vpow.pop %v842
        %v844 = vmul.f32 %v814, 1.442695
        %v845 = vpow.pop %v844
        %v846 = vmul.f32 %v815, 1.442695
        %v847 = vpow.pop %v846
        %v848 = vld [vmem:[#allocation3] sm:$0xff]
        %v849 = vld [vmem:[#allocation3 + $0x8] sm:$0xff]
        %v850 = vld [vmem:[#allocation3 + $0x10] sm:$0xff]
        %v851 = vld [vmem:[#allocation3 + $0x18] sm:$0xff]
        %v852 = vld [vmem:[#allocation3 + $0x20] sm:$0xff]
        %v853 = vld [vmem:[#allocation3 + $0x28] sm:$0xff]
        %v854 = vld [vmem:[#allocation3 + $0x30] sm:$0xff]
        %v855 = vld [vmem:[#allocation3 + $0x38] sm:$0xff]
        %v856 = vld [vmem:[#allocation3 + $0x40] sm:$0xff]
        %v857 = vld [vmem:[#allocation3 + $0x48] sm:$0xff]
        %v858 = vld [vmem:[#allocation3 + $0x50] sm:$0xff]
        %v859 = vld [vmem:[#allocation3 + $0x58] sm:$0xff]
        %v860 = vld [vmem:[#allocation3 + $0x60] sm:$0xff]
        %v861 = vld [vmem:[#allocation3 + $0x68] sm:$0xff]
        %v862 = vld [vmem:[#allocation3 + $0x70] sm:$0xff]
        %v863 = vld [vmem:[#allocation3 + $0x78] sm:$0xff]
        %v864 = vmul.f32 %v817, %v848
        %v865 = vmul.f32 %v819, %v849
        %v866 = vmul.f32 %v821, %v850
        %v867 = vmul.f32 %v823, %v851
        %v868 = vmul.f32 %v825, %v852
        %v869 = vmul.f32 %v827, %v853
        %v870 = vmul.f32 %v829, %v854
        %v871 = vmul.f32 %v831, %v855
        %v872 = vmul.f32 %v833, %v856
        %v873 = vmul.f32 %v835, %v857
        %v874 = vmul.f32 %v837, %v858
        %v875 = vmul.f32 %v839, %v859
        %v876 = vmul.f32 %v841, %v860
        %v877 = vmul.f32 %v843, %v861
        %v878 = vmul.f32 %v845, %v862
        %v879 = vmul.f32 %v847, %v863
        %881 = vset.pattern.permute.xlu0 0
        %882 = vperm.xlu0 %881, %v784
        %v883 = vpop.permute.xlu0 %882
        %886 = vset.pattern.permute.xlu0 0
        %887 = vperm.xlu0 %886, %v785
        %v888 = vpop.permute.xlu0 %887
        %891 = vset.pattern.permute.xlu0 0
        %892 = vperm.xlu0 %891, %v786
        %v893 = vpop.permute.xlu0 %892
        %896 = vset.pattern.permute.xlu0 0
        %897 = vperm.xlu0 %896, %v787
        %v898 = vpop.permute.xlu0 %897
        %901 = vset.pattern.permute.xlu0 0
        %902 = vperm.xlu0 %901, %v788
        %v903 = vpop.permute.xlu0 %902
        %906 = vset.pattern.permute.xlu0 0
        %907 = vperm.xlu0 %906, %v789
        %v908 = vpop.permute.xlu0 %907
        %911 = vset.pattern.permute.xlu0 0
        %912 = vperm.xlu0 %911, %v790
        %v913 = vpop.permute.xlu0 %912
        %916 = vset.pattern.permute.xlu0 0
        %917 = vperm.xlu0 %916, %v791
        %v918 = vpop.permute.xlu0 %917
        %921 = vset.pattern.permute.xlu0 0
        %922 = vperm.xlu0 %921, %v792
        %v923 = vpop.permute.xlu0 %922
        %926 = vset.pattern.permute.xlu0 0
        %927 = vperm.xlu0 %926, %v793
        %v928 = vpop.permute.xlu0 %927
        %931 = vset.pattern.permute.xlu0 0
        %932 = vperm.xlu0 %931, %v794
        %v933 = vpop.permute.xlu0 %932
        %936 = vset.pattern.permute.xlu0 0
        %937 = vperm.xlu0 %936, %v795
        %v938 = vpop.permute.xlu0 %937
        %941 = vset.pattern.permute.xlu0 0
        %942 = vperm.xlu0 %941, %v796
        %v943 = vpop.permute.xlu0 %942
        %946 = vset.pattern.permute.xlu0 0
        %947 = vperm.xlu0 %946, %v797
        %v948 = vpop.permute.xlu0 %947
        %951 = vset.pattern.permute.xlu0 0
        %952 = vperm.xlu0 %951, %v798
        %v953 = vpop.permute.xlu0 %952
        %956 = vset.pattern.permute.xlu0 0
        %957 = vperm.xlu0 %956, %v799
        %v958 = vpop.permute.xlu0 %957
        %v960 = vsub.f32 %v688, %v883
        %v961 = vsub.f32 %v689, %v883
        %v962 = vsub.f32 %v690, %v888
        %v963 = vsub.f32 %v691, %v888
        %v964 = vsub.f32 %v692, %v893
        %v965 = vsub.f32 %v693, %v893
        %v966 = vsub.f32 %v694, %v898
        %v967 = vsub.f32 %v695, %v898
        %v968 = vsub.f32 %v696, %v903
        %v969 = vsub.f32 %v697, %v903
        %v970 = vsub.f32 %v698, %v908
        %v971 = vsub.f32 %v699, %v908
        %v972 = vsub.f32 %v700, %v913
        %v973 = vsub.f32 %v701, %v913
        %v974 = vsub.f32 %v702, %v918
        %v975 = vsub.f32 %v703, %v918
        %v976 = vsub.f32 %v704, %v923
        %v977 = vsub.f32 %v705, %v923
        %v978 = vsub.f32 %v706, %v928
        %v979 = vsub.f32 %v707, %v928
        %v980 = vsub.f32 %v708, %v933
        %v981 = vsub.f32 %v709, %v933
        %v982 = vsub.f32 %v710, %v938
        %v983 = vsub.f32 %v711, %v938
        %v984 = vsub.f32 %v712, %v943
        %v985 = vsub.f32 %v713, %v943
        %v986 = vsub.f32 %v714, %v948
        %v987 = vsub.f32 %v715, %v948
        %v988 = vsub.f32 %v716, %v953
        %v989 = vsub.f32 %v717, %v953
        %v990 = vsub.f32 %v718, %v958
        %v991 = vsub.f32 %v719, %v958
        %v992 = vmul.f32 %v960, 1.442695
        %v993 = vpow.pop %v992
        %v994 = vmul.f32 %v961, 1.442695
        %v995 = vpow.pop %v994
        %v996 = vmul.f32 %v962, 1.442695
        %v997 = vpow.pop %v996
        %v998 = vmul.f32 %v963, 1.442695
        %v999 = vpow.pop %v998
        %v1000 = vmul.f32 %v964, 1.442695
        %v1001 = vpow.pop %v1000
        %v1002 = vmul.f32 %v965, 1.442695
        %v1003 = vpow.pop %v1002
        %v1004 = vmul.f32 %v966, 1.442695
        %v1005 = vpow.pop %v1004
        %v1006 = vmul.f32 %v967, 1.442695
        %v1007 = vpow.pop %v1006
        %v1008 = vmul.f32 %v968, 1.442695
        %v1009 = vpow.pop %v1008
        %v1010 = vmul.f32 %v969, 1.442695
        %v1011 = vpow.pop %v1010
        %v1012 = vmul.f32 %v970, 1.442695
        %v1013 = vpow.pop %v1012
        %v1014 = vmul.f32 %v971, 1.442695
        %v1015 = vpow.pop %v1014
        %v1016 = vmul.f32 %v972, 1.442695
        %v1017 = vpow.pop %v1016
        %v1018 = vmul.f32 %v973, 1.442695
        %v1019 = vpow.pop %v1018
        %v1020 = vmul.f32 %v974, 1.442695
        %v1021 = vpow.pop %v1020
        %v1022 = vmul.f32 %v975, 1.442695
        %v1023 = vpow.pop %v1022
        %v1024 = vmul.f32 %v976, 1.442695
        %v1025 = vpow.pop %v1024
        %v1026 = vmul.f32 %v977, 1.442695
        %v1027 = vpow.pop %v1026
        %v1028 = vmul.f32 %v978, 1.442695
        %v1029 = vpow.pop %v1028
        %v1030 = vmul.f32 %v979, 1.442695
        %v1031 = vpow.pop %v1030
        %v1032 = vmul.f32 %v980, 1.442695
        %v1033 = vpow.pop %v1032
        %v1034 = vmul.f32 %v981, 1.442695
        %v1035 = vpow.pop %v1034
        %v1036 = vmul.f32 %v982, 1.442695
        %v1037 = vpow.pop %v1036
        %v1038 = vmul.f32 %v983, 1.442695
        %v1039 = vpow.pop %v1038
        %v1040 = vmul.f32 %v984, 1.442695
        %v1041 = vpow.pop %v1040
        %v1042 = vmul.f32 %v985, 1.442695
        %v1043 = vpow.pop %v1042
        %v1044 = vmul.f32 %v986, 1.442695
        %v1045 = vpow.pop %v1044
        %v1046 = vmul.f32 %v987, 1.442695
        %v1047 = vpow.pop %v1046
        %v1048 = vmul.f32 %v988, 1.442695
        %v1049 = vpow.pop %v1048
        %v1050 = vmul.f32 %v989, 1.442695
        %v1051 = vpow.pop %v1050
        %v1052 = vmul.f32 %v990, 1.442695
        %v1053 = vpow.pop %v1052
        %v1054 = vmul.f32 %v991, 1.442695
        %v1055 = vpow.pop %v1054
        %v1056 = vadd.f32 %v993, %v995
        %1057 = vadd.xlane.f32.xlu0 %v1056
        %v1058 = vpop.xlane.xlu0 %1057
        %v1059 = vadd.f32 %v997, %v999
        %1060 = vadd.xlane.f32.xlu0 %v1059
        %v1061 = vpop.xlane.xlu0 %1060
        %v1062 = vadd.f32 %v1001, %v1003
        %1063 = vadd.xlane.f32.xlu0 %v1062
        %v1064 = vpop.xlane.xlu0 %1063
        %v1065 = vadd.f32 %v1005, %v1007
        %1066 = vadd.xlane.f32.xlu0 %v1065
        %v1067 = vpop.xlane.xlu0 %1066
        %v1068 = vadd.f32 %v1009, %v1011
        %1069 = vadd.xlane.f32.xlu0 %v1068
        %v1070 = vpop.xlane.xlu0 %1069
        %v1071 = vadd.f32 %v1013, %v1015
        %1072 = vadd.xlane.f32.xlu0 %v1071
        %v1073 = vpop.xlane.xlu0 %1072
        %v1074 = vadd.f32 %v1017, %v1019
        %1075 = vadd.xlane.f32.xlu0 %v1074
        %v1076 = vpop.xlane.xlu0 %1075
        %v1077 = vadd.f32 %v1021, %v1023
        %1078 = vadd.xlane.f32.xlu0 %v1077
        %v1079 = vpop.xlane.xlu0 %1078
        %v1080 = vadd.f32 %v1025, %v1027
        %1081 = vadd.xlane.f32.xlu0 %v1080
        %v1082 = vpop.xlane.xlu0 %1081
        %v1083 = vadd.f32 %v1029, %v1031
        %1084 = vadd.xlane.f32.xlu0 %v1083
        %v1085 = vpop.xlane.xlu0 %1084
        %v1086 = vadd.f32 %v1033, %v1035
        %1087 = vadd.xlane.f32.xlu0 %v1086
        %v1088 = vpop.xlane.xlu0 %1087
        %v1089 = vadd.f32 %v1037, %v1039
        %1090 = vadd.xlane.f32.xlu0 %v1089
        %v1091 = vpop.xlane.xlu0 %1090
        %v1092 = vadd.f32 %v1041, %v1043
        %1093 = vadd.xlane.f32.xlu0 %v1092
        %v1094 = vpop.xlane.xlu0 %1093
        %v1095 = vadd.f32 %v1045, %v1047
        %1096 = vadd.xlane.f32.xlu0 %v1095
        %v1097 = vpop.xlane.xlu0 %1096
        %v1098 = vadd.f32 %v1049, %v1051
        %1099 = vadd.xlane.f32.xlu0 %v1098
        %v1100 = vpop.xlane.xlu0 %1099
        %v1101 = vadd.f32 %v1053, %v1055
        %1102 = vadd.xlane.f32.xlu0 %v1101
        %v1103 = vpop.xlane.xlu0 %1102
        %v1104 = vadd.f32 %v864, %v1058
        %v1105 = vadd.f32 %v865, %v1061
        %v1106 = vadd.f32 %v866, %v1064
        %v1107 = vadd.f32 %v867, %v1067
        %v1108 = vadd.f32 %v868, %v1070
        %v1109 = vadd.f32 %v869, %v1073
        %v1110 = vadd.f32 %v870, %v1076
        %v1111 = vadd.f32 %v871, %v1079
        %v1112 = vadd.f32 %v872, %v1082
        %v1113 = vadd.f32 %v873, %v1085
        %v1114 = vadd.f32 %v874, %v1088
        %v1115 = vadd.f32 %v875, %v1091
        %v1116 = vadd.f32 %v876, %v1094
        %v1117 = vadd.f32 %v877, %v1097
        %v1118 = vadd.f32 %v878, %v1100
        %v1119 = vadd.f32 %v879, %v1103
        %vm1120 = vcmask 7168
        %1121 = vst.msk [vmem:[#allocation3] sm:$0xff] %vm1120, %v1104
        %1122 = vst.msk [vmem:[#allocation3 + $0x8] sm:$0xff] %vm1120, %v1105
        %1123 = vst.msk [vmem:[#allocation3 + $0x10] sm:$0xff] %vm1120, %v1106
        %1124 = vst.msk [vmem:[#allocation3 + $0x18] sm:$0xff] %vm1120, %v1107
        %1125 = vst.msk [vmem:[#allocation3 + $0x20] sm:$0xff] %vm1120, %v1108
        %1126 = vst.msk [vmem:[#allocation3 + $0x28] sm:$0xff] %vm1120, %v1109
        %1127 = vst.msk [vmem:[#allocation3 + $0x30] sm:$0xff] %vm1120, %v1110
        %1128 = vst.msk [vmem:[#allocation3 + $0x38] sm:$0xff] %vm1120, %v1111
        %1129 = vst.msk [vmem:[#allocation3 + $0x40] sm:$0xff] %vm1120, %v1112
        %1130 = vst.msk [vmem:[#allocation3 + $0x48] sm:$0xff] %vm1120, %v1113
        %1131 = vst.msk [vmem:[#allocation3 + $0x50] sm:$0xff] %vm1120, %v1114
        %1132 = vst.msk [vmem:[#allocation3 + $0x58] sm:$0xff] %vm1120, %v1115
        %1133 = vst.msk [vmem:[#allocation3 + $0x60] sm:$0xff] %vm1120, %v1116
        %1134 = vst.msk [vmem:[#allocation3 + $0x68] sm:$0xff] %vm1120, %v1117
        %1135 = vst.msk [vmem:[#allocation3 + $0x70] sm:$0xff] %vm1120, %v1118
        %1136 = vst.msk [vmem:[#allocation3 + $0x78] sm:$0xff] %vm1120, %v1119
        %1137 = vst.msk [vmem:[#allocation2] sm:$0xff] %vm1120, %v784
        %1138 = vst.msk [vmem:[#allocation2 + $0x8] sm:$0xff] %vm1120, %v785
        %1139 = vst.msk [vmem:[#allocation2 + $0x10] sm:$0xff] %vm1120, %v786
        %1140 = vst.msk [vmem:[#allocation2 + $0x18] sm:$0xff] %vm1120, %v787
        %1141 = vst.msk [vmem:[#allocation2 + $0x20] sm:$0xff] %vm1120, %v788
        %1142 = vst.msk [vmem:[#allocation2 + $0x28] sm:$0xff] %vm1120, %v789
        %1143 = vst.msk [vmem:[#allocation2 + $0x30] sm:$0xff] %vm1120, %v790
        %1144 = vst.msk [vmem:[#allocation2 + $0x38] sm:$0xff] %vm1120, %v791
        %1145 = vst.msk [vmem:[#allocation2 + $0x40] sm:$0xff] %vm1120, %v792
        %1146 = vst.msk [vmem:[#allocation2 + $0x48] sm:$0xff] %vm1120, %v793
        %1147 = vst.msk [vmem:[#allocation2 + $0x50] sm:$0xff] %vm1120, %v794
        %1148 = vst.msk [vmem:[#allocation2 + $0x58] sm:$0xff] %vm1120, %v795
        %1149 = vst.msk [vmem:[#allocation2 + $0x60] sm:$0xff] %vm1120, %v796
        %1150 = vst.msk [vmem:[#allocation2 + $0x68] sm:$0xff] %vm1120, %v797
        %1151 = vst.msk [vmem:[#allocation2 + $0x70] sm:$0xff] %vm1120, %v798
        %1152 = vst.msk [vmem:[#allocation2 + $0x78] sm:$0xff] %vm1120, %v799
        // Predicated region
        $region45: #{tpu_custom_call.1} parent=35 // pred_check
          %p1153 = pneg %p278
        $region46: #{tpu_custom_call.1} parent=35 // pred_check_branch
          %1155 = sbr.rel (%p1153) target = $region48
        $region47: #{tpu_custom_call.1} parent=35 // pred_region
          %v1156 = vld [vmem:[#allocation2] sm:$0xff]
          %v1157 = vld [vmem:[#allocation2 + $0x8] sm:$0xff]
          %v1158 = vld [vmem:[#allocation2 + $0x10] sm:$0xff]
          %v1159 = vld [vmem:[#allocation2 + $0x18] sm:$0xff]
          %v1160 = vld [vmem:[#allocation2 + $0x20] sm:$0xff]
          %v1161 = vld [vmem:[#allocation2 + $0x28] sm:$0xff]
          %v1162 = vld [vmem:[#allocation2 + $0x30] sm:$0xff]
          %v1163 = vld [vmem:[#allocation2 + $0x38] sm:$0xff]
          %v1164 = vld [vmem:[#allocation2 + $0x40] sm:$0xff]
          %v1165 = vld [vmem:[#allocation2 + $0x48] sm:$0xff]
          %v1166 = vld [vmem:[#allocation2 + $0x50] sm:$0xff]
          %v1167 = vld [vmem:[#allocation2 + $0x58] sm:$0xff]
          %v1168 = vld [vmem:[#allocation2 + $0x60] sm:$0xff]
          %v1169 = vld [vmem:[#allocation2 + $0x68] sm:$0xff]
          %v1170 = vld [vmem:[#allocation2 + $0x70] sm:$0xff]
          %v1171 = vld [vmem:[#allocation2 + $0x78] sm:$0xff]
          %v1172 = vld [vmem:[#allocation3] sm:$0xff]
          %v1173 = vld [vmem:[#allocation3 + $0x8] sm:$0xff]
          %v1174 = vld [vmem:[#allocation3 + $0x10] sm:$0xff]
          %v1175 = vld [vmem:[#allocation3 + $0x18] sm:$0xff]
          %v1176 = vld [vmem:[#allocation3 + $0x20] sm:$0xff]
          %v1177 = vld [vmem:[#allocation3 + $0x28] sm:$0xff]
          %v1178 = vld [vmem:[#allocation3 + $0x30] sm:$0xff]
          %v1179 = vld [vmem:[#allocation3 + $0x38] sm:$0xff]
          %v1180 = vld [vmem:[#allocation3 + $0x40] sm:$0xff]
          %v1181 = vld [vmem:[#allocation3 + $0x48] sm:$0xff]
          %v1182 = vld [vmem:[#allocation3 + $0x50] sm:$0xff]
          %v1183 = vld [vmem:[#allocation3 + $0x58] sm:$0xff]
          %v1184 = vld [vmem:[#allocation3 + $0x60] sm:$0xff]
          %v1185 = vld [vmem:[#allocation3 + $0x68] sm:$0xff]
          %v1186 = vld [vmem:[#allocation3 + $0x70] sm:$0xff]
          %v1187 = vld [vmem:[#allocation3 + $0x78] sm:$0xff]
          %v1188 = vlog2.pop %v1172
          %v1189 = vmul.f32 %v1188, 0.6931472
          %v1190 = vlog2.pop %v1173
          %v1191 = vmul.f32 %v1190, 0.6931472
          %v1192 = vlog2.pop %v1174
          %v1193 = vmul.f32 %v1192, 0.6931472
          %v1194 = vlog2.pop %v1175
          %v1195 = vmul.f32 %v1194, 0.6931472
          %v1196 = vlog2.pop %v1176
          %v1197 = vmul.f32 %v1196, 0.6931472
          %v1198 = vlog2.pop %v1177
          %v1199 = vmul.f32 %v1198, 0.6931472
          %v1200 = vlog2.pop %v1178
          %v1201 = vmul.f32 %v1200, 0.6931472
          %v1202 = vlog2.pop %v1179
          %v1203 = vmul.f32 %v1202, 0.6931472
          %v1204 = vlog2.pop %v1180
          %v1205 = vmul.f32 %v1204, 0.6931472
          %v1206 = vlog2.pop %v1181
          %v1207 = vmul.f32 %v1206, 0.6931472
          %v1208 = vlog2.pop %v1182
          %v1209 = vmul.f32 %v1208, 0.6931472
          %v1210 = vlog2.pop %v1183
          %v1211 = vmul.f32 %v1210, 0.6931472
          %v1212 = vlog2.pop %v1184
          %v1213 = vmul.f32 %v1212, 0.6931472
          %v1214 = vlog2.pop %v1185
          %v1215 = vmul.f32 %v1214, 0.6931472
          %v1216 = vlog2.pop %v1186
          %v1217 = vmul.f32 %v1216, 0.6931472
          %v1218 = vlog2.pop %v1187
          %v1219 = vmul.f32 %v1218, 0.6931472
          %v1220 = vadd.f32 %v1156, %v1189
          %v1221 = vadd.f32 %v1157, %v1191
          %v1222 = vadd.f32 %v1158, %v1193
          %v1223 = vadd.f32 %v1159, %v1195
          %v1224 = vadd.f32 %v1160, %v1197
          %v1225 = vadd.f32 %v1161, %v1199
          %v1226 = vadd.f32 %v1162, %v1201
          %v1227 = vadd.f32 %v1163, %v1203
          %v1228 = vadd.f32 %v1164, %v1205
          %v1229 = vadd.f32 %v1165, %v1207
          %v1230 = vadd.f32 %v1166, %v1209
          %v1231 = vadd.f32 %v1167, %v1211
          %v1232 = vadd.f32 %v1168, %v1213
          %v1233 = vadd.f32 %v1169, %v1215
          %v1234 = vadd.f32 %v1170, %v1217
          %v1235 = vadd.f32 %v1171, %v1219
          %v1236 = vld [vmem:[%s270] sm:$0xff]
          %v1237 = vld [vmem:[%s270 + $0x8] sm:$0xff]
          %v1238 = vld [vmem:[%s270 + $0x10] sm:$0xff]
          %v1239 = vld [vmem:[%s270 + $0x18] sm:$0xff]
          %v1240 = vld [vmem:[%s270 + $0x20] sm:$0xff]
          %v1241 = vld [vmem:[%s270 + $0x28] sm:$0xff]
          %v1242 = vld [vmem:[%s270 + $0x30] sm:$0xff]
          %v1243 = vld [vmem:[%s270 + $0x38] sm:$0xff]
          %v1244 = vld [vmem:[%s270 + $0x40] sm:$0xff]
          %v1245 = vld [vmem:[%s270 + $0x48] sm:$0xff]
          %v1246 = vld [vmem:[%s270 + $0x50] sm:$0xff]
          %v1247 = vld [vmem:[%s270 + $0x58] sm:$0xff]
          %v1248 = vld [vmem:[%s270 + $0x60] sm:$0xff]
          %v1249 = vld [vmem:[%s270 + $0x68] sm:$0xff]
          %v1250 = vld [vmem:[%s270 + $0x70] sm:$0xff]
          %v1251 = vld [vmem:[%s270 + $0x78] sm:$0xff]
          %v1252 = vsub.f32 %v1220, %v1236
          %v1253 = vsub.f32 %v1221, %v1237
          %v1254 = vsub.f32 %v1222, %v1238
          %v1255 = vsub.f32 %v1223, %v1239
          %v1256 = vsub.f32 %v1224, %v1240
          %v1257 = vsub.f32 %v1225, %v1241
          %v1258 = vsub.f32 %v1226, %v1242
          %v1259 = vsub.f32 %v1227, %v1243
          %v1260 = vsub.f32 %v1228, %v1244
          %v1261 = vsub.f32 %v1229, %v1245
          %v1262 = vsub.f32 %v1230, %v1246
          %v1263 = vsub.f32 %v1231, %v1247
          %v1264 = vsub.f32 %v1232, %v1248
          %v1265 = vsub.f32 %v1233, %v1249
          %v1266 = vsub.f32 %v1234, %v1250
          %v1267 = vsub.f32 %v1235, %v1251
          %1268 = vst.msk [vmem:[%s276] sm:$0xff] %vm1120, %v1252
          %1269 = vst.msk [vmem:[%s276 + $0x8] sm:$0xff] %vm1120, %v1253
          %1270 = vst.msk [vmem:[%s276 + $0x10] sm:$0xff] %vm1120, %v1254
          %1271 = vst.msk [vmem:[%s276 + $0x18] sm:$0xff] %vm1120, %v1255
          %1272 = vst.msk [vmem:[%s276 + $0x20] sm:$0xff] %vm1120, %v1256
          %1273 = vst.msk [vmem:[%s276 + $0x28] sm:$0xff] %vm1120, %v1257
          %1274 = vst.msk [vmem:[%s276 + $0x30] sm:$0xff] %vm1120, %v1258
          %1275 = vst.msk [vmem:[%s276 + $0x38] sm:$0xff] %vm1120, %v1259
          %1276 = vst.msk [vmem:[%s276 + $0x40] sm:$0xff] %vm1120, %v1260
          %1277 = vst.msk [vmem:[%s276 + $0x48] sm:$0xff] %vm1120, %v1261
          %1278 = vst.msk [vmem:[%s276 + $0x50] sm:$0xff] %vm1120, %v1262
          %1279 = vst.msk [vmem:[%s276 + $0x58] sm:$0xff] %vm1120, %v1263
          %1280 = vst.msk [vmem:[%s276 + $0x60] sm:$0xff] %vm1120, %v1264
          %1281 = vst.msk [vmem:[%s276 + $0x68] sm:$0xff] %vm1120, %v1265
          %1282 = vst.msk [vmem:[%s276 + $0x70] sm:$0xff] %vm1120, %v1266
          %1283 = vst.msk [vmem:[%s276 + $0x78] sm:$0xff] %vm1120, %v1267
        $region48: #{tpu_custom_call.1} parent=35 // pred_fallthru
          _
        %s1284 = smul.u32 16, %s20
        %p1285 = scmp.lt.s32.totalorder %s1284, 31
        %s1286 = scalar_select %p1285, %s1284, 31
        %s1287 = smul.addr %s1286, 8
        %s1288 = scalar_lea.vmem %s4, %s1287
        // Predicated region
        $region49: #{tpu_custom_call.1} parent=35 // pred_check
          %p1289 = pneg %p150
        $region50: #{tpu_custom_call.1} parent=35 // pred_check_branch
          %1291 = sbr.rel (%p1289) target = $region52
        $region51: #{tpu_custom_call.1} parent=35 // pred_region
          %s1292 = smul.u32 16, %s20
        $region52: #{tpu_custom_call.1} parent=35 // pred_fallthru
          _
      $region36: #{tpu_custom_call.1} parent=5 // pred_fallthru
        _
      %p1293 = scmp.le.s32.totalorder 2, %s11
      // Predicated region
      $region53: #{tpu_custom_call.1} parent=5 // pred_check
        %p1294 = pneg %p1293
      $region54: #{tpu_custom_call.1} parent=5 // pred_check_branch
        %1296 = sbr.rel (%p1294) target = $region56
      $region55: #{tpu_custom_call.1} parent=5 // pred_region
        %s1297 = ssub.s32 %s11, 2
        // Predicated region
        $region57: #{tpu_custom_call.1} parent=55 // pred_check
          %p1298 = pneg %p156
        $region58: #{tpu_custom_call.1} parent=55 // pred_check_branch
          %1300 = sbr.rel (%p1298) target = $region60
        $region59: #{tpu_custom_call.1} parent=55 // pred_region
          %s1301 = smul.u32 16, %s22
          %p1302 = scmp.lt.s32.totalorder %s1301, 31
          %s1303 = scalar_select %p1302, %s1301, 31
          %s1304 = smul.addr %s1303, 8
          %s1305 = scalar_lea.vmem %s4, %s1304
        $region60: #{tpu_custom_call.1} parent=55 // pred_fallthru
          _
      $region56: #{tpu_custom_call.1} parent=5 // pred_fallthru
        _
    $region6: #{tpu_custom_call.1} parent=1 // loop_footer
      %s15 = sadd.s32 1, %s11
    $region7: #{tpu_custom_call.1} parent=1 // loop_footer_branch
      %10 = sbr.rel target = $region3
    $region8: #{tpu_custom_call.1} parent=1 // loop_exit
      _
    %1306 = vsyncpa [#allocation6], 1
    %s1307 = scalar_lea.sflag [#allocation6], 1
    %1308 = vsyncpa %s1307, 1

</llo_original>
